<compile_context>
chip_gen: v6e
topology: v6e:2x2x1
jax: 0.10.0
libtpu: 0.0.40
codegen_flags: <defaults>
</compile_context>

<pallas_src>
import functools

import jax
import jax.numpy as jnp
from jax import lax
from jax.experimental import pallas as pl
from jax.experimental.pallas import tpu as pltpu


def se_bottleneck_kernel(H, W, B, x_ref, w1_ref, b1_ref, w2_ref, b2_ref,
                         w3_ref, b3_ref, wse1_ref, wse2_ref,
                         o_ref, pad_ref, col_ref):
    Cp = w1_ref.shape[0]
    HW = H * W
    f32, bf16 = jnp.float32, jnp.bfloat16

    # Column-validity masks for the left/right taps of the 3x3 SAME conv,
    # built once per grid step (iota/compare on the VPU; no HBM input).
    col_idx = lax.broadcasted_iota(jnp.int32, (Cp, HW), 1) % W
    not_left = col_idx != 0
    not_right = col_idx != (W - 1)
    zeros_tap = jnp.zeros((Cp, HW), bf16)

    # Zero only the small borders of the flat row-padded conv2 scratch once per
    # grid step; the interior is fully overwritten for every image.
    zeros_border = jnp.zeros((Cp, W + 1), bf16)
    pad_ref[:, 0:W + 1] = zeros_border
    pad_ref[:, HW + W + 1:HW + 2 * W + 2] = zeros_border

    for b in range(B):
        # conv1 (1x1, bias=False, BN scale folded into weights) + shift + relu.
        # The input block arrives bf16 and feeds the MXU directly.
        h1 = jnp.dot(w1_ref[...], x_ref[b], preferred_element_type=f32)
        h1 = jnp.maximum(h1 + b1_ref[...], 0.0)                    # (Cp, HW) f32

        # Flat padded layout: [ zeros(W+1) | h1 (row-major, HW) | zeros(W+1) ],
        # stored bf16 (single cast of Cp*HW values).
        pad_ref[:, W + 1:W + 1 + HW] = h1.astype(bf16)

        # conv2 (3x3, stride=1, padding=1) as ONE im2col MXU dot: tap (di, dj)
        # is a contiguous bf16 lane-slice at static offset di*W + dj; the 6
        # boundary taps get their invalid columns zeroed with a select.
        for di in range(3):
            for dj in range(3):
                k = di * 3 + dj
                off = di * W + dj
                tap = pad_ref[:, off:off + HW]                     # (Cp, HW) bf16
                if dj == 0:
                    tap = jnp.where(not_left, tap, zeros_tap)
                elif dj == 2:
                    tap = jnp.where(not_right, tap, zeros_tap)
                col_ref[k * Cp:(k + 1) * Cp, :] = tap

        h2 = jnp.dot(w2_ref[...], col_ref[...], preferred_element_type=f32)
        h2 = jnp.maximum(h2 + b2_ref[...], 0.0)                    # (Cp, HW) f32

        # conv3 (1x1) + bn3 shift (no relu before SE)
        h3 = jnp.dot(w3_ref[...], h2.astype(bf16),
                     preferred_element_type=f32) + b3_ref[...]     # (C4, HW) f32

        # SE: global average pool over H*W -> fc -> relu -> fc -> sigmoid
        # (bf16 MXU feeds, f32 math).
        pooled = jnp.mean(h3, axis=1, keepdims=True)               # (C4, 1)
        z = jnp.maximum(
            jnp.dot(wse1_ref[...], pooled.astype(bf16),
                    preferred_element_type=f32), 0.0)              # (C4//r, 1)
        gate = jax.nn.sigmoid(
            jnp.dot(wse2_ref[...], z.astype(bf16),
                    preferred_element_type=f32))                   # (C4, 1)

        # channel scale + identity residual (stride=1, downsample=None) + relu.
        # Re-read the resident bf16 input block here (short live range), add in
        # f32, store bf16.
        o_ref[b] = jnp.maximum(h3 * gate + x_ref[b].astype(f32),
                               0.0).astype(o_ref.dtype)


def _pick_images_per_step(N, HW):
    """Largest divisor of N giving roughly <= ~1024 pixels of work per step."""
    target = max(1, 1024 // max(HW, 1))
    best = 1
    for b in range(1, N + 1):
        if N % b == 0 and b <= target:
            best = b
    return best


def se_bottleneck(x_nchw, params):
    """SEBottleneck forward (stride=1, downsample=None). NCHW in / NCHW out (bf16)."""
    (w1, s1, b1, w2, s2, b2, w3, s3, b3, wse1, wse2) = params
    N, Cin, H, W = x_nchw.shape
    Cp = w1.shape[1]
    C4 = w3.shape[1]
    assert Cin == C4, "identity residual requires inplanes == planes * expansion"
    HW = H * W
    f32, bf16 = jnp.float32, jnp.bfloat16

    # One-time host-side parameter prep:
    #  - fold BN scale into conv weights; keep only the per-channel shift
    #  - transpose to (Cout, K) so activations stay channel-major (NCHW-native)
    #  - cast MXU operands to bf16 (accumulation stays f32 in-kernel)
    w1f = (w1.T * s1[:, None]).astype(bf16)                        # (Cp, Cin)
    w2f = (w2.reshape(9 * Cp, Cp).T * s2[:, None]).astype(bf16)    # (Cp, 9*Cp)
    w3f = (w3.T * s3[:, None]).astype(bf16)                        # (C4, Cp)
    b1c = b1.reshape(Cp, 1).astype(f32)
    b2c = b2.reshape(Cp, 1).astype(f32)
    b3c = b3.reshape(C4, 1).astype(f32)
    wse1t = wse1.T.astype(bf16)                                    # (C4//r, C4)
    wse2t = wse2.T.astype(bf16)                                    # (C4, C4//r)

    # bf16 at the HBM boundary (the block is HBM-bound at real shapes); the
    # reshape is layout-preserving and free.
    x2 = x_nchw.reshape(N, Cin, HW).astype(bf16)

    B = _pick_images_per_step(N, HW)   # amortize grid-step overhead at small HW
    kernel = functools.partial(se_bottleneck_kernel, H, W, B)

    def full_spec(a):
        nd = a.ndim
        return pl.BlockSpec(a.shape, lambda *_: (0,) * nd)

    # Right-size the VMEM budget from the actual per-step need instead of a
    # flat number; stays under v7x's 64 MiB physical VMEM.
    weight_bytes = sum(int(a.size) * a.dtype.itemsize
                       for a in (w1f, b1c, w2f, b2c, w3f, b3c, wse1t, wse2t))
    io_bytes = 2 * (B * Cin * HW * 2 + B * C4 * HW * 2)        # double-buffered
    scratch_bytes = Cp * (HW + 2 * W + 2) * 2 + 9 * Cp * HW * 2
    temp_bytes = (2 * Cp + 3 * C4) * HW * 4                    # f32 h1/h2/h3/resid
    need = io_bytes + 2 * weight_bytes + scratch_bytes + temp_bytes
    vmem_limit = int(min(max(need + (8 << 20), 16 << 20), 64 << 20))

    out2 = pl.pallas_call(
        kernel,
        out_shape=jax.ShapeDtypeStruct((N, C4, HW), bf16),
        grid=(N // B,),                                  # B images per grid step
        in_specs=[pl.BlockSpec((B, Cin, HW), lambda n: (n, 0, 0)),
                  full_spec(w1f), full_spec(b1c),
                  full_spec(w2f), full_spec(b2c),
                  full_spec(w3f), full_spec(b3c),
                  full_spec(wse1t), full_spec(wse2t)],
        out_specs=pl.BlockSpec((B, C4, HW), lambda n: (n, 0, 0)),
        scratch_shapes=[
            pltpu.VMEM((Cp, HW + 2 * W + 2), bf16),  # flat row-padded conv2 input
            pltpu.VMEM((9 * Cp, HW), bf16),          # im2col patch
        ],
        compiler_params=pltpu.CompilerParams(
            dimension_semantics=("parallel",),       # batch axis -> megacore
            vmem_limit_bytes=vmem_limit),
    )(x2, w1f, b1c, w2f, b2c, w3f, b3c, wse1t, wse2t)
    return out2.reshape(N, C4, H, W)


def init_params(key, inplanes, planes, reduction):
    """Deterministic synthetic parameters; eval-mode BN folded to scale/shift."""
    C4 = planes * 4
    eps = 1e-5
    ks = jax.random.split(key, 16)

    def bn_fold(kg, kb, km, kv, c):
        gamma = jax.random.uniform(kg, (c,), jnp.float32, 0.5, 1.5)
        beta = jax.random.normal(kb, (c,), jnp.float32) * 0.1
        mean = jax.random.normal(km, (c,), jnp.float32) * 0.1
        var = jax.random.uniform(kv, (c,), jnp.float32, 0.5, 1.5)
        scale = gamma / jnp.sqrt(var + eps)
        shift = beta - mean * scale
        return scale, shift

    w1 = jax.random.normal(ks[0], (inplanes, planes), jnp.float32) * 0.2
    s1, b1 = bn_fold(ks[1], ks[2], ks[3], ks[4], planes)
    w2 = jax.random.normal(ks[5], (3, 3, planes, planes), jnp.float32) * 0.2
    s2, b2 = bn_fold(ks[6], ks[7], ks[8], ks[9], planes)
    w3 = jax.random.normal(ks[10], (planes, C4), jnp.float32) * 0.2
    s3, b3 = bn_fold(ks[11], ks[12], ks[13], ks[14], C4)
    kse1, kse2 = jax.random.split(ks[15])
    wse1 = jax.random.normal(kse1, (C4, C4 // reduction), jnp.float32) * 0.2
    wse2 = jax.random.normal(kse2, (C4 // reduction, C4), jnp.float32) * 0.2
    return (w1, s1, b1, w2, s2, b2, w3, s3, b3, wse1, wse2)


def ref_forward(x_nchw, params):
    """Pure-JAX f32 reference (lax.conv) for correctness checking."""
    (w1, s1, b1, w2, s2, b2, w3, s3, b3, wse1, wse2) = params
    x = jnp.transpose(x_nchw, (0, 2, 3, 1)).astype(jnp.float32)
    dn = ('NHWC', 'HWIO', 'NHWC')
    prec = lax.Precision.HIGHEST
    h = lax.conv_general_dilated(x, w1.reshape(1, 1, *w1.shape), (1, 1), 'SAME',
                                 dimension_numbers=dn, precision=prec)
    h = jnp.maximum(h * s1 + b1, 0.0)
    h = lax.conv_general_dilated(h, w2, (1, 1), 'SAME',
                                 dimension_numbers=dn, precision=prec)
    h = jnp.maximum(h * s2 + b2, 0.0)
    h = lax.conv_general_dilated(h, w3.reshape(1, 1, *w3.shape), (1, 1), 'SAME',
                                 dimension_numbers=dn, precision=prec)
    h = h * s3 + b3
    pooled = jnp.mean(h, axis=(1, 2))
    z = jnp.maximum(pooled @ wse1, 0.0)
    gate = jax.nn.sigmoid(z @ wse2)
    h = h * gate[:, None, None, :]
    out = jnp.maximum(h + x, 0.0)
    return jnp.transpose(out, (0, 3, 1, 2))


if __name__ == "__main__":
    inplanes, planes, reduction = 16, 4, 4   # planes*4 == inplanes -> identity residual
    N, H, W = 2, 8, 8
    key = jax.random.PRNGKey(0)
    kx, kp = jax.random.split(key)
    # Quantize the input to bf16-representable values so the kernel (bf16 HBM
    # boundary) and the f32 reference see the same effective input.
    x = jax.random.normal(kx, (N, inplanes, H, W), jnp.float32)
    x = x.astype(jnp.bfloat16).astype(jnp.float32)
    params = init_params(kp, inplanes, planes, reduction)

    out = se_bottleneck(x, params)
    out = jax.block_until_ready(out)

    assert out.shape == (N, planes * 4, H, W), out.shape
    assert out.dtype == jnp.bfloat16, out.dtype
    ref = ref_forward(x, params)
    out_f32 = out.astype(jnp.float32)
    max_err = float(jnp.max(jnp.abs(out_f32 - ref)))
    # Tolerance accounts for bf16 activations at the HBM boundary, bf16 im2col
    # scratch and bf16 MXU feeds (f32 accumulation / elementwise math in-kernel).
    assert jnp.allclose(out_f32, ref, atol=8e-2, rtol=8e-2), f"max_err={max_err}"
    print("KERNEL_OK")
</pallas_src>

<mosaic_0001>
module attributes {stable_mosaic.version = 11 : i64} {
  func.func @se_bottleneck_kernel(%arg0: i32, %arg1: memref<2x16x64xbf16, #tpu.memory_space<vmem>>, %arg2: memref<4x16xbf16, #tpu.memory_space<vmem>>, %arg3: memref<4x1xf32, #tpu.memory_space<vmem>>, %arg4: memref<4x36xbf16, #tpu.memory_space<vmem>>, %arg5: memref<4x1xf32, #tpu.memory_space<vmem>>, %arg6: memref<16x4xbf16, #tpu.memory_space<vmem>>, %arg7: memref<16x1xf32, #tpu.memory_space<vmem>>, %arg8: memref<4x16xbf16, #tpu.memory_space<vmem>>, %arg9: memref<16x4xbf16, #tpu.memory_space<vmem>>, %arg10: memref<2x16x64xbf16, #tpu.memory_space<vmem>>, %arg11: memref<4x82xbf16, #tpu.memory_space<vmem>>, %arg12: memref<36x64xbf16, #tpu.memory_space<vmem>>) attributes {dimension_semantics = [#tpu.dimension_semantics<parallel>], iteration_bounds = array<i64: 1>, scalar_prefetch = 0 : i64, scratch_operands = 2 : i64, tpu.core_type = #tpu.core_type<tc>, window_params = [{transform_indices = @transform_0, window_bounds = array<i64: 2, 16, 64>}, {pipeline_mode = #tpu.pipeline_mode<synchronous>, transform_indices = @transform_1, window_bounds = array<i64: 4, 16>}, {pipeline_mode = #tpu.pipeline_mode<synchronous>, transform_indices = @transform_2, window_bounds = array<i64: 4, 1>}, {pipeline_mode = #tpu.pipeline_mode<synchronous>, transform_indices = @transform_3, window_bounds = array<i64: 4, 36>}, {pipeline_mode = #tpu.pipeline_mode<synchronous>, transform_indices = @transform_4, window_bounds = array<i64: 4, 1>}, {pipeline_mode = #tpu.pipeline_mode<synchronous>, transform_indices = @transform_5, window_bounds = array<i64: 16, 4>}, {pipeline_mode = #tpu.pipeline_mode<synchronous>, transform_indices = @transform_6, window_bounds = array<i64: 16, 1>}, {pipeline_mode = #tpu.pipeline_mode<synchronous>, transform_indices = @transform_7, window_bounds = array<i64: 4, 16>}, {pipeline_mode = #tpu.pipeline_mode<synchronous>, transform_indices = @transform_8, window_bounds = array<i64: 16, 4>}, {transform_indices = @transform_9, window_bounds = array<i64: 2, 16, 64>}]} {
    %0 = tpu.iota {dimensions = array<i32: 1>} : vector<4x64xi32>
    %c8_i32 = arith.constant 8 : i32
    %c0_i32 = arith.constant 0 : i32
    %1 = arith.cmpi eq, %c8_i32, %c0_i32 : i32
    %c1_i32 = arith.constant 1 : i32
    %2 = arith.select %1, %c1_i32, %c8_i32 : i32
    %3 = vector.broadcast %2 : i32 to vector<4x64xi32>
    %4 = arith.remsi %0, %3 : vector<4x64xi32>
    %c0_i32_0 = arith.constant 0 : i32
    %5 = vector.broadcast %c0_i32_0 : i32 to vector<4x64xi32>
    %6 = arith.cmpi ne, %4, %5 : vector<4x64xi32>
    %c0_i32_1 = arith.constant 0 : i32
    %7 = vector.broadcast %c0_i32_1 : i32 to vector<4x64xi32>
    %8 = arith.cmpi slt, %4, %7 : vector<4x64xi32>
    %c0_i32_2 = arith.constant 0 : i32
    %9 = arith.cmpi slt, %2, %c0_i32_2 : i32
    %10 = vector.broadcast %9 : i1 to vector<4x64xi1>
    %11 = vector.broadcast %10 : vector<4x64xi1> to vector<4x64xi1>
    %12 = arith.xori %8, %11 : vector<4x64xi1>
    %13 = arith.andi %12, %6 : vector<4x64xi1>
    %14 = vector.broadcast %2 : i32 to vector<4x64xi32>
    %15 = arith.addi %4, %14 : vector<4x64xi32>
    %16 = arith.select %13, %15, %4 : vector<4x64xi1>, vector<4x64xi32>
    %c0_i32_3 = arith.constant 0 : i32
    %17 = vector.broadcast %c0_i32_3 : i32 to vector<4x64xi32>
    %18 = arith.cmpi ne, %16, %17 : vector<4x64xi32>
    %c7_i32 = arith.constant 7 : i32
    %19 = vector.broadcast %c7_i32 : i32 to vector<4x64xi32>
    %20 = arith.cmpi ne, %16, %19 : vector<4x64xi32>
    %cst = arith.constant 0.000000e+00 : bf16
    %21 = vector.broadcast %cst : bf16 to vector<4x64xbf16>
    %cst_4 = arith.constant 0.000000e+00 : bf16
    %22 = vector.broadcast %cst_4 : bf16 to vector<4x9xbf16>
    %c0 = arith.constant 0 : index
    %c0_5 = arith.constant 0 : index
    %23 = vector.load %arg11[%c0, %c0_5] : memref<4x82xbf16, #tpu.memory_space<vmem>>, vector<4x9xbf16>
    tpu.vector_store %arg11[%c0, %c0_5], %22 {strides = array<i32>} : memref<4x82xbf16, #tpu.memory_space<vmem>>, vector<4x9xbf16>,
    %c0_6 = arith.constant 0 : index
    %c73 = arith.constant 73 : index
    %24 = vector.load %arg11[%c0_6, %c73] : memref<4x82xbf16, #tpu.memory_space<vmem>>, vector<4x9xbf16>
    tpu.vector_store %arg11[%c0_6, %c73], %22 {strides = array<i32>} : memref<4x82xbf16, #tpu.memory_space<vmem>>, vector<4x9xbf16>,
    %c0_7 = arith.constant 0 : index
    %c0_8 = arith.constant 0 : index
    %25 = vector.load %arg2[%c0_7, %c0_8] : memref<4x16xbf16, #tpu.memory_space<vmem>>, vector<4x16xbf16>
    %c0_9 = arith.constant 0 : index
    %c0_10 = arith.constant 0 : index
    %c0_11 = arith.constant 0 : index
    %26 = vector.load %arg1[%c0_9, %c0_10, %c0_11] : memref<2x16x64xbf16, #tpu.memory_space<vmem>>, vector<1x16x64xbf16>
    %27 = vector.shape_cast %26 : vector<1x16x64xbf16> to vector<16x64xbf16>
    %cst_12 = arith.constant dense<0.000000e+00> : vector<4x64xf32>
    %28 = tpu.matmul %25, %27, %cst_12 {dimension_numbers = #tpu.dot_dimension_numbers<[1], [0], [0], [1], [0, 0, 1, 1], [], []>} : vector<4x16xbf16>, vector<16x64xbf16>, vector<4x64xf32> -> vector<4x64xf32>
    %c0_13 = arith.constant 0 : index
    %c0_14 = arith.constant 0 : index
    %29 = vector.load %arg3[%c0_13, %c0_14] : memref<4x1xf32, #tpu.memory_space<vmem>>, vector<4x1xf32>
    %30 = vector.broadcast %29 : vector<4x1xf32> to vector<4x64xf32>
    %31 = arith.addf %28, %30 : vector<4x64xf32>
    %cst_15 = arith.constant 0.000000e+00 : f32
    %32 = vector.broadcast %cst_15 : f32 to vector<4x64xf32>
    %33 = arith.maximumf %31, %32 : vector<4x64xf32>
    %34 = arith.truncf %33 : vector<4x64xf32> to vector<4x64xbf16>
    %c0_16 = arith.constant 0 : index
    %c9 = arith.constant 9 : index
    %35 = vector.load %arg11[%c0_16, %c9] : memref<4x82xbf16, #tpu.memory_space<vmem>>, vector<4x64xbf16>
    tpu.vector_store %arg11[%c0_16, %c9], %34 {strides = array<i32>} : memref<4x82xbf16, #tpu.memory_space<vmem>>, vector<4x64xbf16>,
    %c0_17 = arith.constant 0 : index
    %c0_18 = arith.constant 0 : index
    %36 = vector.load %arg11[%c0_17, %c0_18] : memref<4x82xbf16, #tpu.memory_space<vmem>>, vector<4x64xbf16>
    %37 = arith.select %18, %36, %21 : vector<4x64xi1>, vector<4x64xbf16>
    %c0_19 = arith.constant 0 : index
    %c0_20 = arith.constant 0 : index
    %38 = vector.load %arg12[%c0_19, %c0_20] : memref<36x64xbf16, #tpu.memory_space<vmem>>, vector<4x64xbf16>
    tpu.vector_store %arg12[%c0_19, %c0_20], %37 {strides = array<i32>} : memref<36x64xbf16, #tpu.memory_space<vmem>>, vector<4x64xbf16>,
    %c0_21 = arith.constant 0 : index
    %c1 = arith.constant 1 : index
    %39 = vector.load %arg11[%c0_21, %c1] : memref<4x82xbf16, #tpu.memory_space<vmem>>, vector<4x64xbf16>
    %c4 = arith.constant 4 : index
    %c0_22 = arith.constant 0 : index
    %40 = vector.load %arg12[%c4, %c0_22] : memref<36x64xbf16, #tpu.memory_space<vmem>>, vector<4x64xbf16>
    tpu.vector_store %arg12[%c4, %c0_22], %39 {strides = array<i32>} : memref<36x64xbf16, #tpu.memory_space<vmem>>, vector<4x64xbf16>,
    %c0_23 = arith.constant 0 : index
    %c2 = arith.constant 2 : index
    %41 = vector.load %arg11[%c0_23, %c2] : memref<4x82xbf16, #tpu.memory_space<vmem>>, vector<4x64xbf16>
    %42 = arith.select %20, %41, %21 : vector<4x64xi1>, vector<4x64xbf16>
    %c8 = arith.constant 8 : index
    %c0_24 = arith.constant 0 : index
    %43 = vector.load %arg12[%c8, %c0_24] : memref<36x64xbf16, #tpu.memory_space<vmem>>, vector<4x64xbf16>
    tpu.vector_store %arg12[%c8, %c0_24], %42 {strides = array<i32>} : memref<36x64xbf16, #tpu.memory_space<vmem>>, vector<4x64xbf16>,
    %c0_25 = arith.constant 0 : index
    %c8_26 = arith.constant 8 : index
    %44 = vector.load %arg11[%c0_25, %c8_26] : memref<4x82xbf16, #tpu.memory_space<vmem>>, vector<4x64xbf16>
    %45 = arith.select %18, %44, %21 : vector<4x64xi1>, vector<4x64xbf16>
    %c12 = arith.constant 12 : index
    %c0_27 = arith.constant 0 : index
    %46 = vector.load %arg12[%c12, %c0_27] : memref<36x64xbf16, #tpu.memory_space<vmem>>, vector<4x64xbf16>
    tpu.vector_store %arg12[%c12, %c0_27], %45 {strides = array<i32>} : memref<36x64xbf16, #tpu.memory_space<vmem>>, vector<4x64xbf16>,
    %c0_28 = arith.constant 0 : index
    %c9_29 = arith.constant 9 : index
    %47 = vector.load %arg11[%c0_28, %c9_29] : memref<4x82xbf16, #tpu.memory_space<vmem>>, vector<4x64xbf16>
    %c16 = arith.constant 16 : index
    %c0_30 = arith.constant 0 : index
    %48 = vector.load %arg12[%c16, %c0_30] : memref<36x64xbf16, #tpu.memory_space<vmem>>, vector<4x64xbf16>
    tpu.vector_store %arg12[%c16, %c0_30], %47 {strides = array<i32>} : memref<36x64xbf16, #tpu.memory_space<vmem>>, vector<4x64xbf16>,
    %c0_31 = arith.constant 0 : index
    %c10 = arith.constant 10 : index
    %49 = vector.load %arg11[%c0_31, %c10] : memref<4x82xbf16, #tpu.memory_space<vmem>>, vector<4x64xbf16>
    %50 = arith.select %20, %49, %21 : vector<4x64xi1>, vector<4x64xbf16>
    %c20 = arith.constant 20 : index
    %c0_32 = arith.constant 0 : index
    %51 = vector.load %arg12[%c20, %c0_32] : memref<36x64xbf16, #tpu.memory_space<vmem>>, vector<4x64xbf16>
    tpu.vector_store %arg12[%c20, %c0_32], %50 {strides = array<i32>} : memref<36x64xbf16, #tpu.memory_space<vmem>>, vector<4x64xbf16>,
    %c0_33 = arith.constant 0 : index
    %c16_34 = arith.constant 16 : index
    %52 = vector.load %arg11[%c0_33, %c16_34] : memref<4x82xbf16, #tpu.memory_space<vmem>>, vector<4x64xbf16>
    %53 = arith.select %18, %52, %21 : vector<4x64xi1>, vector<4x64xbf16>
    %c24 = arith.constant 24 : index
    %c0_35 = arith.constant 0 : index
    %54 = vector.load %arg12[%c24, %c0_35] : memref<36x64xbf16, #tpu.memory_space<vmem>>, vector<4x64xbf16>
    tpu.vector_store %arg12[%c24, %c0_35], %53 {strides = array<i32>} : memref<36x64xbf16, #tpu.memory_space<vmem>>, vector<4x64xbf16>,
    %c0_36 = arith.constant 0 : index
    %c17 = arith.constant 17 : index
    %55 = vector.load %arg11[%c0_36, %c17] : memref<4x82xbf16, #tpu.memory_space<vmem>>, vector<4x64xbf16>
    %c28 = arith.constant 28 : index
    %c0_37 = arith.constant 0 : index
    %56 = vector.load %arg12[%c28, %c0_37] : memref<36x64xbf16, #tpu.memory_space<vmem>>, vector<4x64xbf16>
    tpu.vector_store %arg12[%c28, %c0_37], %55 {strides = array<i32>} : memref<36x64xbf16, #tpu.memory_space<vmem>>, vector<4x64xbf16>,
    %c0_38 = arith.constant 0 : index
    %c18 = arith.constant 18 : index
    %57 = vector.load %arg11[%c0_38, %c18] : memref<4x82xbf16, #tpu.memory_space<vmem>>, vector<4x64xbf16>
    %58 = arith.select %20, %57, %21 : vector<4x64xi1>, vector<4x64xbf16>
    %c32 = arith.constant 32 : index
    %c0_39 = arith.constant 0 : index
    %59 = vector.load %arg12[%c32, %c0_39] : memref<36x64xbf16, #tpu.memory_space<vmem>>, vector<4x64xbf16>
    tpu.vector_store %arg12[%c32, %c0_39], %58 {strides = array<i32>} : memref<36x64xbf16, #tpu.memory_space<vmem>>, vector<4x64xbf16>,
    %c0_40 = arith.constant 0 : index
    %c0_41 = arith.constant 0 : index
    %60 = vector.load %arg4[%c0_40, %c0_41] : memref<4x36xbf16, #tpu.memory_space<vmem>>, vector<4x36xbf16>
    %c0_42 = arith.constant 0 : index
    %c0_43 = arith.constant 0 : index
    %61 = vector.load %arg12[%c0_42, %c0_43] : memref<36x64xbf16, #tpu.memory_space<vmem>>, vector<36x64xbf16>
    %cst_44 = arith.constant dense<0.000000e+00> : vector<4x64xf32>
    %62 = tpu.matmul %60, %61, %cst_44 {dimension_numbers = #tpu.dot_dimension_numbers<[1], [0], [0], [1], [0, 0, 1, 1], [], []>} : vector<4x36xbf16>, vector<36x64xbf16>, vector<4x64xf32> -> vector<4x64xf32>
    %c0_45 = arith.constant 0 : index
    %c0_46 = arith.constant 0 : index
    %63 = vector.load %arg5[%c0_45, %c0_46] : memref<4x1xf32, #tpu.memory_space<vmem>>, vector<4x1xf32>
    %64 = vector.broadcast %63 : vector<4x1xf32> to vector<4x64xf32>
    %65 = arith.addf %62, %64 : vector<4x64xf32>
    %cst_47 = arith.constant 0.000000e+00 : f32
    %66 = vector.broadcast %cst_47 : f32 to vector<4x64xf32>
    %67 = arith.maximumf %65, %66 : vector<4x64xf32>
    %c0_48 = arith.constant 0 : index
    %c0_49 = arith.constant 0 : index
    %68 = vector.load %arg6[%c0_48, %c0_49] : memref<16x4xbf16, #tpu.memory_space<vmem>>, vector<16x4xbf16>
    %69 = arith.truncf %67 : vector<4x64xf32> to vector<4x64xbf16>
    %cst_50 = arith.constant dense<0.000000e+00> : vector<16x64xf32>
    %70 = tpu.matmul %68, %69, %cst_50 {dimension_numbers = #tpu.dot_dimension_numbers<[1], [0], [0], [1], [0, 0, 1, 1], [], []>} : vector<16x4xbf16>, vector<4x64xbf16>, vector<16x64xf32> -> vector<16x64xf32>
    %c0_51 = arith.constant 0 : index
    %c0_52 = arith.constant 0 : index
    %71 = vector.load %arg7[%c0_51, %c0_52] : memref<16x1xf32, #tpu.memory_space<vmem>>, vector<16x1xf32>
    %72 = vector.broadcast %71 : vector<16x1xf32> to vector<16x64xf32>
    %73 = arith.addf %70, %72 : vector<16x64xf32>
    %cst_53 = arith.constant dense<0.000000e+00> : vector<16xf32>
    %74 = vector.multi_reduction <add>, %73, %cst_53 [1] : vector<16x64xf32> to vector<16xf32>
    %75 = vector.shape_cast %74 : vector<16xf32> to vector<16x1xf32>
    %cst_54 = arith.constant 6.400000e+01 : f32
    %76 = vector.broadcast %cst_54 : f32 to vector<16x1xf32>
    %77 = arith.divf %75, %76 : vector<16x1xf32>
    %c0_55 = arith.constant 0 : index
    %c0_56 = arith.constant 0 : index
    %78 = vector.load %arg8[%c0_55, %c0_56] : memref<4x16xbf16, #tpu.memory_space<vmem>>, vector<4x16xbf16>
    %79 = arith.truncf %77 : vector<16x1xf32> to vector<16x1xbf16>
    %cst_57 = arith.constant dense<0.000000e+00> : vector<4x1xf32>
    %80 = tpu.matmul %78, %79, %cst_57 {dimension_numbers = #tpu.dot_dimension_numbers<[1], [0], [0], [1], [0, 0, 1, 1], [], []>} : vector<4x16xbf16>, vector<16x1xbf16>, vector<4x1xf32> -> vector<4x1xf32>
    %cst_58 = arith.constant 0.000000e+00 : f32
    %81 = vector.broadcast %cst_58 : f32 to vector<4x1xf32>
    %82 = arith.maximumf %80, %81 : vector<4x1xf32>
    %c0_59 = arith.constant 0 : index
    %c0_60 = arith.constant 0 : index
    %83 = vector.load %arg9[%c0_59, %c0_60] : memref<16x4xbf16, #tpu.memory_space<vmem>>, vector<16x4xbf16>
    %84 = arith.truncf %82 : vector<4x1xf32> to vector<4x1xbf16>
    %cst_61 = arith.constant dense<0.000000e+00> : vector<16x1xf32>
    %85 = tpu.matmul %83, %84, %cst_61 {dimension_numbers = #tpu.dot_dimension_numbers<[1], [0], [0], [1], [0, 0, 1, 1], [], []>} : vector<16x4xbf16>, vector<4x1xbf16>, vector<16x1xf32> -> vector<16x1xf32>
    %86 = arith.negf %85 : vector<16x1xf32>
    %87 = math.exp %86 : vector<16x1xf32>
    %cst_62 = arith.constant 1.000000e+00 : f32
    %88 = vector.broadcast %cst_62 : f32 to vector<16x1xf32>
    %89 = arith.addf %88, %87 : vector<16x1xf32>
    %90 = arith.divf %88, %89 : vector<16x1xf32>
    %91 = vector.broadcast %90 : vector<16x1xf32> to vector<16x64xf32>
    %92 = arith.mulf %73, %91 : vector<16x64xf32>
    %c0_63 = arith.constant 0 : index
    %c0_64 = arith.constant 0 : index
    %c0_65 = arith.constant 0 : index
    %93 = vector.load %arg1[%c0_63, %c0_64, %c0_65] : memref<2x16x64xbf16, #tpu.memory_space<vmem>>, vector<1x16x64xbf16>
    %94 = vector.shape_cast %93 : vector<1x16x64xbf16> to vector<16x64xbf16>
    %95 = arith.extf %94 : vector<16x64xbf16> to vector<16x64xf32>
    %96 = arith.addf %92, %95 : vector<16x64xf32>
    %cst_66 = arith.constant 0.000000e+00 : f32
    %97 = vector.broadcast %cst_66 : f32 to vector<16x64xf32>
    %98 = arith.maximumf %96, %97 : vector<16x64xf32>
    %99 = arith.truncf %98 : vector<16x64xf32> to vector<16x64xbf16>
    %c0_67 = arith.constant 0 : index
    %c0_68 = arith.constant 0 : index
    %c0_69 = arith.constant 0 : index
    %100 = vector.load %arg10[%c0_67, %c0_68, %c0_69] : memref<2x16x64xbf16, #tpu.memory_space<vmem>>, vector<1x16x64xbf16>
    %101 = vector.shape_cast %100 : vector<1x16x64xbf16> to vector<16x64xbf16>
    %102 = vector.shape_cast %99 : vector<16x64xbf16> to vector<1x16x64xbf16>
    tpu.vector_store %arg10[%c0_67, %c0_68, %c0_69], %102 {strides = array<i32>} : memref<2x16x64xbf16, #tpu.memory_space<vmem>>, vector<1x16x64xbf16>,
    %c0_70 = arith.constant 0 : index
    %c0_71 = arith.constant 0 : index
    %103 = vector.load %arg2[%c0_70, %c0_71] : memref<4x16xbf16, #tpu.memory_space<vmem>>, vector<4x16xbf16>
    %c1_72 = arith.constant 1 : index
    %c0_73 = arith.constant 0 : index
    %c0_74 = arith.constant 0 : index
    %104 = vector.load %arg1[%c1_72, %c0_73, %c0_74] : memref<2x16x64xbf16, #tpu.memory_space<vmem>>, vector<1x16x64xbf16>
    %105 = vector.shape_cast %104 : vector<1x16x64xbf16> to vector<16x64xbf16>
    %cst_75 = arith.constant dense<0.000000e+00> : vector<4x64xf32>
    %106 = tpu.matmul %103, %105, %cst_75 {dimension_numbers = #tpu.dot_dimension_numbers<[1], [0], [0], [1], [0, 0, 1, 1], [], []>} : vector<4x16xbf16>, vector<16x64xbf16>, vector<4x64xf32> -> vector<4x64xf32>
    %c0_76 = arith.constant 0 : index
    %c0_77 = arith.constant 0 : index
    %107 = vector.load %arg3[%c0_76, %c0_77] : memref<4x1xf32, #tpu.memory_space<vmem>>, vector<4x1xf32>
    %108 = vector.broadcast %107 : vector<4x1xf32> to vector<4x64xf32>
    %109 = arith.addf %106, %108 : vector<4x64xf32>
    %cst_78 = arith.constant 0.000000e+00 : f32
    %110 = vector.broadcast %cst_78 : f32 to vector<4x64xf32>
    %111 = arith.maximumf %109, %110 : vector<4x64xf32>
    %112 = arith.truncf %111 : vector<4x64xf32> to vector<4x64xbf16>
    %c0_79 = arith.constant 0 : index
    %c9_80 = arith.constant 9 : index
    %113 = vector.load %arg11[%c0_79, %c9_80] : memref<4x82xbf16, #tpu.memory_space<vmem>>, vector<4x64xbf16>
    tpu.vector_store %arg11[%c0_79, %c9_80], %112 {strides = array<i32>} : memref<4x82xbf16, #tpu.memory_space<vmem>>, vector<4x64xbf16>,
    %c0_81 = arith.constant 0 : index
    %c0_82 = arith.constant 0 : index
    %114 = vector.load %arg11[%c0_81, %c0_82] : memref<4x82xbf16, #tpu.memory_space<vmem>>, vector<4x64xbf16>
    %115 = arith.select %18, %114, %21 : vector<4x64xi1>, vector<4x64xbf16>
    %c0_83 = arith.constant 0 : index
    %c0_84 = arith.constant 0 : index
    %116 = vector.load %arg12[%c0_83, %c0_84] : memref<36x64xbf16, #tpu.memory_space<vmem>>, vector<4x64xbf16>
    tpu.vector_store %arg12[%c0_83, %c0_84], %115 {strides = array<i32>} : memref<36x64xbf16, #tpu.memory_space<vmem>>, vector<4x64xbf16>,
    %c0_85 = arith.constant 0 : index
    %c1_86 = arith.constant 1 : index
    %117 = vector.load %arg11[%c0_85, %c1_86] : memref<4x82xbf16, #tpu.memory_space<vmem>>, vector<4x64xbf16>
    %c4_87 = arith.constant 4 : index
    %c0_88 = arith.constant 0 : index
    %118 = vector.load %arg12[%c4_87, %c0_88] : memref<36x64xbf16, #tpu.memory_space<vmem>>, vector<4x64xbf16>
    tpu.vector_store %arg12[%c4_87, %c0_88], %117 {strides = array<i32>} : memref<36x64xbf16, #tpu.memory_space<vmem>>, vector<4x64xbf16>,
    %c0_89 = arith.constant 0 : index
    %c2_90 = arith.constant 2 : index
    %119 = vector.load %arg11[%c0_89, %c2_90] : memref<4x82xbf16, #tpu.memory_space<vmem>>, vector<4x64xbf16>
    %120 = arith.select %20, %119, %21 : vector<4x64xi1>, vector<4x64xbf16>
    %c8_91 = arith.constant 8 : index
    %c0_92 = arith.constant 0 : index
    %121 = vector.load %arg12[%c8_91, %c0_92] : memref<36x64xbf16, #tpu.memory_space<vmem>>, vector<4x64xbf16>
    tpu.vector_store %arg12[%c8_91, %c0_92], %120 {strides = array<i32>} : memref<36x64xbf16, #tpu.memory_space<vmem>>, vector<4x64xbf16>,
    %c0_93 = arith.constant 0 : index
    %c8_94 = arith.constant 8 : index
    %122 = vector.load %arg11[%c0_93, %c8_94] : memref<4x82xbf16, #tpu.memory_space<vmem>>, vector<4x64xbf16>
    %123 = arith.select %18, %122, %21 : vector<4x64xi1>, vector<4x64xbf16>
    %c12_95 = arith.constant 12 : index
    %c0_96 = arith.constant 0 : index
    %124 = vector.load %arg12[%c12_95, %c0_96] : memref<36x64xbf16, #tpu.memory_space<vmem>>, vector<4x64xbf16>
    tpu.vector_store %arg12[%c12_95, %c0_96], %123 {strides = array<i32>} : memref<36x64xbf16, #tpu.memory_space<vmem>>, vector<4x64xbf16>,
    %c0_97 = arith.constant 0 : index
    %c9_98 = arith.constant 9 : index
    %125 = vector.load %arg11[%c0_97, %c9_98] : memref<4x82xbf16, #tpu.memory_space<vmem>>, vector<4x64xbf16>
    %c16_99 = arith.constant 16 : index
    %c0_100 = arith.constant 0 : index
    %126 = vector.load %arg12[%c16_99, %c0_100] : memref<36x64xbf16, #tpu.memory_space<vmem>>, vector<4x64xbf16>
    tpu.vector_store %arg12[%c16_99, %c0_100], %125 {strides = array<i32>} : memref<36x64xbf16, #tpu.memory_space<vmem>>, vector<4x64xbf16>,
    %c0_101 = arith.constant 0 : index
    %c10_102 = arith.constant 10 : index
    %127 = vector.load %arg11[%c0_101, %c10_102] : memref<4x82xbf16, #tpu.memory_space<vmem>>, vector<4x64xbf16>
    %128 = arith.select %20, %127, %21 : vector<4x64xi1>, vector<4x64xbf16>
    %c20_103 = arith.constant 20 : index
    %c0_104 = arith.constant 0 : index
    %129 = vector.load %arg12[%c20_103, %c0_104] : memref<36x64xbf16, #tpu.memory_space<vmem>>, vector<4x64xbf16>
    tpu.vector_store %arg12[%c20_103, %c0_104], %128 {strides = array<i32>} : memref<36x64xbf16, #tpu.memory_space<vmem>>, vector<4x64xbf16>,
    %c0_105 = arith.constant 0 : index
    %c16_106 = arith.constant 16 : index
    %130 = vector.load %arg11[%c0_105, %c16_106] : memref<4x82xbf16, #tpu.memory_space<vmem>>, vector<4x64xbf16>
    %131 = arith.select %18, %130, %21 : vector<4x64xi1>, vector<4x64xbf16>
    %c24_107 = arith.constant 24 : index
    %c0_108 = arith.constant 0 : index
    %132 = vector.load %arg12[%c24_107, %c0_108] : memref<36x64xbf16, #tpu.memory_space<vmem>>, vector<4x64xbf16>
    tpu.vector_store %arg12[%c24_107, %c0_108], %131 {strides = array<i32>} : memref<36x64xbf16, #tpu.memory_space<vmem>>, vector<4x64xbf16>,
    %c0_109 = arith.constant 0 : index
    %c17_110 = arith.constant 17 : index
    %133 = vector.load %arg11[%c0_109, %c17_110] : memref<4x82xbf16, #tpu.memory_space<vmem>>, vector<4x64xbf16>
    %c28_111 = arith.constant 28 : index
    %c0_112 = arith.constant 0 : index
    %134 = vector.load %arg12[%c28_111, %c0_112] : memref<36x64xbf16, #tpu.memory_space<vmem>>, vector<4x64xbf16>
    tpu.vector_store %arg12[%c28_111, %c0_112], %133 {strides = array<i32>} : memref<36x64xbf16, #tpu.memory_space<vmem>>, vector<4x64xbf16>,
    %c0_113 = arith.constant 0 : index
    %c18_114 = arith.constant 18 : index
    %135 = vector.load %arg11[%c0_113, %c18_114] : memref<4x82xbf16, #tpu.memory_space<vmem>>, vector<4x64xbf16>
    %136 = arith.select %20, %135, %21 : vector<4x64xi1>, vector<4x64xbf16>
    %c32_115 = arith.constant 32 : index
    %c0_116 = arith.constant 0 : index
    %137 = vector.load %arg12[%c32_115, %c0_116] : memref<36x64xbf16, #tpu.memory_space<vmem>>, vector<4x64xbf16>
    tpu.vector_store %arg12[%c32_115, %c0_116], %136 {strides = array<i32>} : memref<36x64xbf16, #tpu.memory_space<vmem>>, vector<4x64xbf16>,
    %c0_117 = arith.constant 0 : index
    %c0_118 = arith.constant 0 : index
    %138 = vector.load %arg4[%c0_117, %c0_118] : memref<4x36xbf16, #tpu.memory_space<vmem>>, vector<4x36xbf16>
    %c0_119 = arith.constant 0 : index
    %c0_120 = arith.constant 0 : index
    %139 = vector.load %arg12[%c0_119, %c0_120] : memref<36x64xbf16, #tpu.memory_space<vmem>>, vector<36x64xbf16>
    %cst_121 = arith.constant dense<0.000000e+00> : vector<4x64xf32>
    %140 = tpu.matmul %138, %139, %cst_121 {dimension_numbers = #tpu.dot_dimension_numbers<[1], [0], [0], [1], [0, 0, 1, 1], [], []>} : vector<4x36xbf16>, vector<36x64xbf16>, vector<4x64xf32> -> vector<4x64xf32>
    %c0_122 = arith.constant 0 : index
    %c0_123 = arith.constant 0 : index
    %141 = vector.load %arg5[%c0_122, %c0_123] : memref<4x1xf32, #tpu.memory_space<vmem>>, vector<4x1xf32>
    %142 = vector.broadcast %141 : vector<4x1xf32> to vector<4x64xf32>
    %143 = arith.addf %140, %142 : vector<4x64xf32>
    %cst_124 = arith.constant 0.000000e+00 : f32
    %144 = vector.broadcast %cst_124 : f32 to vector<4x64xf32>
    %145 = arith.maximumf %143, %144 : vector<4x64xf32>
    %c0_125 = arith.constant 0 : index
    %c0_126 = arith.constant 0 : index
    %146 = vector.load %arg6[%c0_125, %c0_126] : memref<16x4xbf16, #tpu.memory_space<vmem>>, vector<16x4xbf16>
    %147 = arith.truncf %145 : vector<4x64xf32> to vector<4x64xbf16>
    %cst_127 = arith.constant dense<0.000000e+00> : vector<16x64xf32>
    %148 = tpu.matmul %146, %147, %cst_127 {dimension_numbers = #tpu.dot_dimension_numbers<[1], [0], [0], [1], [0, 0, 1, 1], [], []>} : vector<16x4xbf16>, vector<4x64xbf16>, vector<16x64xf32> -> vector<16x64xf32>
    %c0_128 = arith.constant 0 : index
    %c0_129 = arith.constant 0 : index
    %149 = vector.load %arg7[%c0_128, %c0_129] : memref<16x1xf32, #tpu.memory_space<vmem>>, vector<16x1xf32>
    %150 = vector.broadcast %149 : vector<16x1xf32> to vector<16x64xf32>
    %151 = arith.addf %148, %150 : vector<16x64xf32>
    %cst_130 = arith.constant dense<0.000000e+00> : vector<16xf32>
    %152 = vector.multi_reduction <add>, %151, %cst_130 [1] : vector<16x64xf32> to vector<16xf32>
    %153 = vector.shape_cast %152 : vector<16xf32> to vector<16x1xf32>
    %cst_131 = arith.constant 6.400000e+01 : f32
    %154 = vector.broadcast %cst_131 : f32 to vector<16x1xf32>
    %155 = arith.divf %153, %154 : vector<16x1xf32>
    %c0_132 = arith.constant 0 : index
    %c0_133 = arith.constant 0 : index
    %156 = vector.load %arg8[%c0_132, %c0_133] : memref<4x16xbf16, #tpu.memory_space<vmem>>, vector<4x16xbf16>
    %157 = arith.truncf %155 : vector<16x1xf32> to vector<16x1xbf16>
    %cst_134 = arith.constant dense<0.000000e+00> : vector<4x1xf32>
    %158 = tpu.matmul %156, %157, %cst_134 {dimension_numbers = #tpu.dot_dimension_numbers<[1], [0], [0], [1], [0, 0, 1, 1], [], []>} : vector<4x16xbf16>, vector<16x1xbf16>, vector<4x1xf32> -> vector<4x1xf32>
    %cst_135 = arith.constant 0.000000e+00 : f32
    %159 = vector.broadcast %cst_135 : f32 to vector<4x1xf32>
    %160 = arith.maximumf %158, %159 : vector<4x1xf32>
    %c0_136 = arith.constant 0 : index
    %c0_137 = arith.constant 0 : index
    %161 = vector.load %arg9[%c0_136, %c0_137] : memref<16x4xbf16, #tpu.memory_space<vmem>>, vector<16x4xbf16>
    %162 = arith.truncf %160 : vector<4x1xf32> to vector<4x1xbf16>
    %cst_138 = arith.constant dense<0.000000e+00> : vector<16x1xf32>
    %163 = tpu.matmul %161, %162, %cst_138 {dimension_numbers = #tpu.dot_dimension_numbers<[1], [0], [0], [1], [0, 0, 1, 1], [], []>} : vector<16x4xbf16>, vector<4x1xbf16>, vector<16x1xf32> -> vector<16x1xf32>
    %164 = arith.negf %163 : vector<16x1xf32>
    %165 = math.exp %164 : vector<16x1xf32>
    %cst_139 = arith.constant 1.000000e+00 : f32
    %166 = vector.broadcast %cst_139 : f32 to vector<16x1xf32>
    %167 = arith.addf %166, %165 : vector<16x1xf32>
    %168 = arith.divf %166, %167 : vector<16x1xf32>
    %169 = vector.broadcast %168 : vector<16x1xf32> to vector<16x64xf32>
    %170 = arith.mulf %151, %169 : vector<16x64xf32>
    %c1_140 = arith.constant 1 : index
    %c0_141 = arith.constant 0 : index
    %c0_142 = arith.constant 0 : index
    %171 = vector.load %arg1[%c1_140, %c0_141, %c0_142] : memref<2x16x64xbf16, #tpu.memory_space<vmem>>, vector<1x16x64xbf16>
    %172 = vector.shape_cast %171 : vector<1x16x64xbf16> to vector<16x64xbf16>
    %173 = arith.extf %172 : vector<16x64xbf16> to vector<16x64xf32>
    %174 = arith.addf %170, %173 : vector<16x64xf32>
    %cst_143 = arith.constant 0.000000e+00 : f32
    %175 = vector.broadcast %cst_143 : f32 to vector<16x64xf32>
    %176 = arith.maximumf %174, %175 : vector<16x64xf32>
    %177 = arith.truncf %176 : vector<16x64xf32> to vector<16x64xbf16>
    %c1_144 = arith.constant 1 : index
    %c0_145 = arith.constant 0 : index
    %c0_146 = arith.constant 0 : index
    %178 = vector.load %arg10[%c1_144, %c0_145, %c0_146] : memref<2x16x64xbf16, #tpu.memory_space<vmem>>, vector<1x16x64xbf16>
    %179 = vector.shape_cast %178 : vector<1x16x64xbf16> to vector<16x64xbf16>
    %180 = vector.shape_cast %177 : vector<16x64xbf16> to vector<1x16x64xbf16>
    tpu.vector_store %arg10[%c1_144, %c0_145, %c0_146], %180 {strides = array<i32>} : memref<2x16x64xbf16, #tpu.memory_space<vmem>>, vector<1x16x64xbf16>,
    return
  }
  func.func @transform_0(%arg0: i32) -> (i32, i32, i32) {
    %c0_i32 = arith.constant 0 : i32
    %c0_i32_0 = arith.constant 0 : i32
    %c0_i32_1 = arith.constant 0 : i32
    return %arg0, %c0_i32, %c0_i32_0 : i32, i32, i32
  }
  func.func @transform_1(%arg0: i32) -> (i32, i32) {
    %c0_i32 = arith.constant 0 : i32
    %c0_i32_0 = arith.constant 0 : i32
    %c0_i32_1 = arith.constant 0 : i32
    return %c0_i32, %c0_i32_0 : i32, i32
  }
  func.func @transform_2(%arg0: i32) -> (i32, i32) {
    %c0_i32 = arith.constant 0 : i32
    %c0_i32_0 = arith.constant 0 : i32
    %c0_i32_1 = arith.constant 0 : i32
    return %c0_i32, %c0_i32_0 : i32, i32
  }
  func.func @transform_3(%arg0: i32) -> (i32, i32) {
    %c0_i32 = arith.constant 0 : i32
    %c0_i32_0 = arith.constant 0 : i32
    %c0_i32_1 = arith.constant 0 : i32
    return %c0_i32, %c0_i32_0 : i32, i32
  }
  func.func @transform_4(%arg0: i32) -> (i32, i32) {
    %c0_i32 = arith.constant 0 : i32
    %c0_i32_0 = arith.constant 0 : i32
    %c0_i32_1 = arith.constant 0 : i32
    return %c0_i32, %c0_i32_0 : i32, i32
  }
  func.func @transform_5(%arg0: i32) -> (i32, i32) {
    %c0_i32 = arith.constant 0 : i32
    %c0_i32_0 = arith.constant 0 : i32
    %c0_i32_1 = arith.constant 0 : i32
    return %c0_i32, %c0_i32_0 : i32, i32
  }
  func.func @transform_6(%arg0: i32) -> (i32, i32) {
    %c0_i32 = arith.constant 0 : i32
    %c0_i32_0 = arith.constant 0 : i32
    %c0_i32_1 = arith.constant 0 : i32
    return %c0_i32, %c0_i32_0 : i32, i32
  }
  func.func @transform_7(%arg0: i32) -> (i32, i32) {
    %c0_i32 = arith.constant 0 : i32
    %c0_i32_0 = arith.constant 0 : i32
    %c0_i32_1 = arith.constant 0 : i32
    return %c0_i32, %c0_i32_0 : i32, i32
  }
  func.func @transform_8(%arg0: i32) -> (i32, i32) {
    %c0_i32 = arith.constant 0 : i32
    %c0_i32_0 = arith.constant 0 : i32
    %c0_i32_1 = arith.constant 0 : i32
    return %c0_i32, %c0_i32_0 : i32, i32
  }
  func.func @transform_9(%arg0: i32) -> (i32, i32, i32) {
    %c0_i32 = arith.constant 0 : i32
    %c0_i32_0 = arith.constant 0 : i32
    %c0_i32_1 = arith.constant 0 : i32
    return %arg0, %c0_i32, %c0_i32_0 : i32, i32, i32
  }
}

</mosaic_0001>

<llo_original>
// kernel: tpu_custom_call.1
$region0: #{tpu_custom_call.1}
  #allocation0 [shape = 'u32[]', space=smem, size = 0x4, offset = 0x4, fixed_abs, tag = 'smem constant byte address 0x4 - core index']
  #allocation1 [shape = 'u32[144,128]{1,0:T(1,128)}', space=vmem, size = 0x12000, scoped, tag = 'internal scratch']
  #allocation2 [shape = 'bf16[4,82]{1,0:T(4,128)(2,1)}', space=vmem, size = 0x400, scoped, tag = 'scratch operand']
  #allocation3 [shape = 'bf16[36,64]{1,0:T(8,128)(2,1)}', space=vmem, size = 0x2800, scoped, tag = 'scratch operand']
  %s0 = inlined_call_operand.vmem [shape: bf16[2,16,64], index: 0, kind: input, shape index: {}]
  %s1 = inlined_call_operand.vmem [shape: bf16[4,16], index: 1, kind: input, shape index: {}]
  %s2 = inlined_call_operand.vmem [shape: f32[4,1], index: 2, kind: input, shape index: {}]
  %s3 = inlined_call_operand.vmem [shape: bf16[4,36], index: 3, kind: input, shape index: {}]
  %s4 = inlined_call_operand.vmem [shape: f32[4,1], index: 4, kind: input, shape index: {}]
  %s5 = inlined_call_operand.vmem [shape: bf16[16,4], index: 5, kind: input, shape index: {}]
  %s6 = inlined_call_operand.vmem [shape: f32[16,1], index: 6, kind: input, shape index: {}]
  %s7 = inlined_call_operand.vmem [shape: bf16[4,16], index: 7, kind: input, shape index: {}]
  %s8 = inlined_call_operand.vmem [shape: bf16[16,4], index: 8, kind: input, shape index: {}]
  %s9 = inlined_call_operand.hbm [shape: bf16[2,16,64], index: 9, kind: output, shape index: {}]
  %s10 = sld [smem:[#allocation0]]
  $region46: #{tpu_custom_call.1} parent=0
    _
  %s12 = ssub.s32 1, %s10
  %s13 = scalar_select 0, %s12, %s10
  $region1: #{tpu_custom_call.1} parent=0
    #allocation4 [shape = 'u8[8192]{0}', space=vmem, size = 0x2000, scoped, tag = 'output window, operand 0, single buffered']
    #allocation5 [shape = 's32[1]{0}', space=sflag, size = 0x4, scoped, tag = 'scoped memory for tpu_custom_call.1']
    %14 = vsyncpa [#allocation5], 0
    // Predicated region
    $region2: #{tpu_custom_call.1} parent=1 // pred_check
      _
    $region3: #{tpu_custom_call.1} parent=1 // pred_check_branch
      %16 = sbr.rel (0) target = $region5
    $region4: #{tpu_custom_call.1} parent=1 // pred_region
      _
    $region5: #{tpu_custom_call.1} parent=1 // pred_fallthru
      _
    // Predicated region
    $region6: #{tpu_custom_call.1} parent=1 // pred_check
      _
    $region7: #{tpu_custom_call.1} parent=1 // pred_check_branch
      %18 = sbr.rel (0) target = $region9
    $region8: #{tpu_custom_call.1} parent=1 // pred_region
      _
    $region9: #{tpu_custom_call.1} parent=1 // pred_fallthru
      _
    // Predicated region
    $region10: #{tpu_custom_call.1} parent=1 // pred_check
      _
    $region11: #{tpu_custom_call.1} parent=1 // pred_check_branch
      %20 = sbr.rel (0) target = $region13
    $region12: #{tpu_custom_call.1} parent=1 // pred_region
      _
    $region13: #{tpu_custom_call.1} parent=1 // pred_fallthru
      _
    // Predicated region
    $region14: #{tpu_custom_call.1} parent=1 // pred_check
      _
    $region15: #{tpu_custom_call.1} parent=1 // pred_check_branch
      %22 = sbr.rel (0) target = $region17
    $region16: #{tpu_custom_call.1} parent=1 // pred_region
      _
    $region17: #{tpu_custom_call.1} parent=1 // pred_fallthru
      _
    // Predicated region
    $region18: #{tpu_custom_call.1} parent=1 // pred_check
      _
    $region19: #{tpu_custom_call.1} parent=1 // pred_check_branch
      %24 = sbr.rel (0) target = $region21
    $region20: #{tpu_custom_call.1} parent=1 // pred_region
      _
    $region21: #{tpu_custom_call.1} parent=1 // pred_fallthru
      _
    // Predicated region
    $region22: #{tpu_custom_call.1} parent=1 // pred_check
      _
    $region23: #{tpu_custom_call.1} parent=1 // pred_check_branch
      %26 = sbr.rel (0) target = $region25
    $region24: #{tpu_custom_call.1} parent=1 // pred_region
      _
    $region25: #{tpu_custom_call.1} parent=1 // pred_fallthru
      _
    // Predicated region
    $region26: #{tpu_custom_call.1} parent=1 // pred_check
      _
    $region27: #{tpu_custom_call.1} parent=1 // pred_check_branch
      %28 = sbr.rel (0) target = $region29
    $region28: #{tpu_custom_call.1} parent=1 // pred_region
      _
    $region29: #{tpu_custom_call.1} parent=1 // pred_fallthru
      _
    // Predicated region
    $region30: #{tpu_custom_call.1} parent=1 // pred_check
      _
    $region31: #{tpu_custom_call.1} parent=1 // pred_check_branch
      %30 = sbr.rel (0) target = $region33
    $region32: #{tpu_custom_call.1} parent=1 // pred_region
      _
    $region33: #{tpu_custom_call.1} parent=1 // pred_fallthru
      _
    // Predicated region
    $region34: #{tpu_custom_call.1} parent=1 // pred_check
      _
    $region35: #{tpu_custom_call.1} parent=1 // pred_check_branch
      %32 = sbr.rel (0) target = $region37
    $region36: #{tpu_custom_call.1} parent=1 // pred_region
      _
    $region37: #{tpu_custom_call.1} parent=1 // pred_fallthru
      _
    %v36 = vlaneseq
    %v37 = vand.u32 %v36, 127
    %vm38 = vcmp.lt.s32.totalorder %v37, 0
    %v39 = vsub.s32 0, %v37
    %v40 = vsel %vm38, %v39, %v37
    %v41 = vshrl.u32 %v40, 3
    %v42 = vand.u32 %v40, 7
    %v43 = vsub.s32 0, %v42
    %v44 = vsel %vm38, %v43, %v42
    %vm45 = vcmp.ne.s32.totalorder %v44, 0
    %vm46 = vcmp.lt.s32.totalorder %v44, 0
    %vm47 = vmand %vm46, %vm45
    %v48 = vadd.s32 %v44, 8
    %v49 = vsel %vm47, %v48, %v44
    %vm50 = vcmp.ne.s32.totalorder %v49, 0
    %vm51 = vcmp.ne.s32.totalorder %v49, 7
    %vm52 = vcmask 66560
    %53 = vst.msk [vmem:[#allocation2] sm:$0x3] %vm52, 0
    %vm54 = vcmask 665160
    %55 = vst.msk [vmem:[#allocation2] sm:$0x3] %vm54, 0
    %v56 = vld [vmem:[%s1] sm:$0x3]
    %v57 = vld [vmem:[%s0] sm:$0xf]
    %v58 = vld [vmem:[%s0 + $0x4] sm:$0xf]
    %v59 = vld [vmem:[%s2] sm:$0xf]
    %61 = vset.pattern.permute.xlu0 0
    %62 = vperm.xlu0 %61, %v59
    %v63 = vpop.permute.xlu0 %62
    %v67 = vunpack.c.l.b16 %v57
    %v68 = vunpack.c.l.b16 %v58
    %v69 = vpack.c.b16 %v68, %v67
    %vm71 = vcmask 130048
    %v73 = vsel %vm71, %v56, 0
    %75 = vmatprep.subr.bf16.mxu0 0
    %76 = vmatpush1.bf16.msra.mxu0 0
    %77 = vmatprep.subr.bf16.mxu0 0
    %78 = vmatpush1.bf16.msra.mxu0 0
    %79 = vmatprep.subr.bf16.mxu0 0
    %80 = vmatpush1.bf16.msra.mxu0 0
    %81 = vmatprep.subr.bf16.mxu0 0
    %82 = vmatpush1.bf16.msra.mxu0 0
    %83 = vmatprep.subr.bf16.mxu0 0
    %84 = vmatpush1.bf16.msra.mxu0 0
    %85 = vmatprep.subr.bf16.mxu0 0
    %86 = vmatpush1.bf16.msra.mxu0 0
    %87 = vmatprep.subr.bf16.mxu0 0
    %88 = vmatpush1.bf16.msra.mxu0 0
    %89 = vmatprep.subr.bf16.mxu0 0
    %90 = vmatpush1.bf16.msra.mxu0 %v69
    %91 = vmatprep.subr.bf16.mxu0 0
    %92 = vmatpush2.bf16.msra.mxu0 0
    %93 = vmatprep.subr.bf16.mxu0 0
    %94 = vmatpush2.bf16.msra.mxu0 0
    %95 = vmatprep.subr.bf16.mxu0 0
    %96 = vmatpush2.bf16.msra.mxu0 0
    %97 = vmatprep.subr.bf16.mxu0 0
    %98 = vmatpush2.bf16.msra.mxu0 0
    %99 = vmatprep.subr.bf16.mxu0 0
    %100 = vmatpush2.bf16.msra.mxu0 0
    %101 = vmatprep.subr.bf16.mxu0 0
    %102 = vmatpush2.bf16.msra.mxu0 0
    %103 = vmatprep.subr.bf16.mxu0 0
    %104 = vmatpush2.bf16.msra.mxu0 0
    %105 = vmatprep.subr.bf16.mxu0 0
    %106 = vmatpush2.bf16.msra.mxu0 0
    %107 = vmatprep.mubr.bf16.mxu0 0
    %108 = vmatmul.mubr.bf16.gmra.mxu0 %v73
    %v109 = vpop.f32.mrf.mxu0
    %v110 = vadd.f32 %v63, %v109
    %v111 = vpop.f32.mrf.mxu0
    %v112 = vpop.f32.mrf.mxu0
    %v113 = vpop.f32.mrf.mxu0
    %114 = vdwg.mxu0
    %v115 = vmax.f32 %v110, 0.0
    %v116 = vpack.c.bf16 %v115, %v115
    %v119 = vunpack.c.l.s4 1983009808
    %v120 = vunpack.c.0.s8 %v119
    %v121 = vlaneseq
    %v122 = vshrl.u32 %v121, 7
    %v123 = vsub.s32 %v120, %v122
    %v124 = vrot.slane %v116, %v123
    %125 = vrot.lane.b32.xlu0 %v124, 9
    %v126 = vpop.permute.xlu0 %125
    %vm128 = vcmask 590920
    %129 = vst.msk [vmem:[#allocation2] sm:$0x3] %vm128, %v126
    %v130 = vld [vmem:[#allocation2] sm:$0x3]
    %v131 = vsel %vm50, 1, 0
    %v132 = vpack.c.b16 %v131, %v131
    %vm133 = vcmp.ne.s16.totalorder %v132, 0
    %v134 = vsel %vm133, %v130, 0
    %vm135 = vcmask 517120
    %136 = vst.msk [vmem:[#allocation3] sm:$0x3] %vm135, %v134
    %v137 = vld [vmem:[#allocation2] sm:$0x3]
    %v139 = vcombine.low %v137, %v137
    %v141 = vunpack.c.l.s4 1983009808
    %v142 = vunpack.c.0.s8 %v141
    %v143 = vlaneseq
    %v144 = vshrl.u32 %v143, 7
    %v145 = vsub.s32 %v142, %v144
    %v146 = vrot.slane %v139, %v145
    %147 = vrot.lane.b32.xlu0 %v146, 127
    %v148 = vpop.permute.xlu0 %147
    %vm150 = vcmask 519170
    %151 = vst.msk [vmem:[#allocation3] sm:$0xc] %vm150, %v148
    %v152 = vld [vmem:[#allocation2] sm:$0x3]
    %v153 = vsel %vm51, 1, 0
    %v154 = vpack.c.b16 %v153, %v153
    %vm155 = vcmp.ne.s16.totalorder %v154, 0
    %v156 = vsel %vm155, 65537, 0
    %157 = vrot.lane.b32.xlu0 %v156, 2
    %v158 = vpop.permute.xlu0 %157
    %vm159 = vcmp.ne.s16.totalorder %v158, 0
    %v160 = vsel %vm159, %v152, 0
    %v163 = vunpack.c.l.s4 1983009808
    %v164 = vunpack.c.0.s8 %v163
    %v165 = vlaneseq
    %v166 = vshrl.u32 %v165, 7
    %v167 = vsub.s32 %v164, %v166
    %v168 = vrot.slane %v160, %v167
    %169 = vrot.lane.b32.xlu0 %v168, 126
    %v170 = vpop.permute.xlu0 %169
    %172 = vst.msk [vmem:[#allocation3 + $0x4] sm:$0x3] %vm135, %v170
    %v173 = vld [vmem:[#allocation2] sm:$0x3]
    %v174 = vsel %vm133, 65537, 0
    %175 = vrot.lane.b32.xlu0 %v174, 8
    %v176 = vpop.permute.xlu0 %175
    %vm177 = vcmp.ne.s16.totalorder %v176, 0
    %v178 = vsel %vm177, %v173, 0
    %v180 = vcombine.low %v178, %v178
    %v182 = vunpack.c.l.s4 1983009808
    %v183 = vunpack.c.0.s8 %v182
    %v184 = vlaneseq
    %v185 = vshrl.u32 %v184, 7
    %v186 = vsub.s32 %v183, %v185
    %v187 = vrot.slane %v180, %v186
    %188 = vrot.lane.b32.xlu0 %v187, 120
    %v189 = vpop.permute.xlu0 %188
    %191 = vst.msk [vmem:[#allocation3 + $0x4] sm:$0xc] %vm150, %v189
    %v192 = vld [vmem:[#allocation2] sm:$0x3]
    %v195 = vunpack.c.l.s4 1983009808
    %v196 = vunpack.c.0.s8 %v195
    %v197 = vlaneseq
    %v198 = vshrl.u32 %v197, 7
    %v199 = vsub.s32 %v196, %v198
    %v200 = vrot.slane %v192, %v199
    %201 = vrot.lane.b32.xlu0 %v200, 119
    %v202 = vpop.permute.xlu0 %201
    %204 = vst.msk [vmem:[#allocation3 + $0x8] sm:$0x3] %vm135, %v202
    %v205 = vld [vmem:[#allocation2] sm:$0x3]
    %206 = vrot.lane.b32.xlu0 %v156, 10
    %v207 = vpop.permute.xlu0 %206
    %vm208 = vcmp.ne.s16.totalorder %v207, 0
    %v209 = vsel %vm208, %v205, 0
    %v211 = vcombine.low %v209, %v209
    %v213 = vunpack.c.l.s4 1983009808
    %v214 = vunpack.c.0.s8 %v213
    %v215 = vlaneseq
    %v216 = vshrl.u32 %v215, 7
    %v217 = vsub.s32 %v214, %v216
    %v218 = vrot.slane %v211, %v217
    %219 = vrot.lane.b32.xlu0 %v218, 118
    %v220 = vpop.permute.xlu0 %219
    %222 = vst.msk [vmem:[#allocation3 + $0x8] sm:$0xc] %vm150, %v220
    %v223 = vld [vmem:[#allocation2] sm:$0x3]
    %224 = vrot.lane.b32.xlu0 %v174, 16
    %v225 = vpop.permute.xlu0 %224
    %vm226 = vcmp.ne.s16.totalorder %v225, 0
    %v227 = vsel %vm226, %v223, 0
    %v230 = vunpack.c.l.s4 1983009808
    %v231 = vunpack.c.0.s8 %v230
    %v232 = vlaneseq
    %v233 = vshrl.u32 %v232, 7
    %v234 = vsub.s32 %v231, %v233
    %v235 = vrot.slane %v227, %v234
    %236 = vrot.lane.b32.xlu0 %v235, 112
    %v237 = vpop.permute.xlu0 %236
    %239 = vst.msk [vmem:[#allocation3 + $0xc] sm:$0x3] %vm135, %v237
    %v240 = vld [vmem:[#allocation2] sm:$0x3]
    %v242 = vcombine.low %v240, %v240
    %v244 = vunpack.c.l.s4 1983009808
    %v245 = vunpack.c.0.s8 %v244
    %v246 = vlaneseq
    %v247 = vshrl.u32 %v246, 7
    %v248 = vsub.s32 %v245, %v247
    %v249 = vrot.slane %v242, %v248
    %250 = vrot.lane.b32.xlu0 %v249, 111
    %v251 = vpop.permute.xlu0 %250
    %253 = vst.msk [vmem:[#allocation3 + $0xc] sm:$0xc] %vm150, %v251
    %v254 = vld [vmem:[#allocation2] sm:$0x3]
    %255 = vrot.lane.b32.xlu0 %v156, 18
    %v256 = vpop.permute.xlu0 %255
    %vm257 = vcmp.ne.s16.totalorder %v256, 0
    %v258 = vsel %vm257, %v254, 0
    %v261 = vunpack.c.l.s4 1983009808
    %v262 = vunpack.c.0.s8 %v261
    %v263 = vlaneseq
    %v264 = vshrl.u32 %v263, 7
    %v265 = vsub.s32 %v262, %v264
    %v266 = vrot.slane %v258, %v265
    %267 = vrot.lane.b32.xlu0 %v266, 110
    %v268 = vpop.permute.xlu0 %267
    %270 = vst.msk [vmem:[#allocation3 + $0x10] sm:$0x3] %vm135, %v268
    %v271 = vld [vmem:[%s3] sm:$0x3]
    %v272 = vld [vmem:[#allocation3] sm:$0xf]
    %v273 = vld [vmem:[#allocation3 + $0x4] sm:$0xf]
    %v274 = vld [vmem:[#allocation3 + $0x8] sm:$0xf]
    %v275 = vld [vmem:[#allocation3 + $0xc] sm:$0xf]
    %v276 = vld [vmem:[#allocation3 + $0x10] sm:$0x3]
    %v277 = vld [vmem:[%s4] sm:$0xf]
    %279 = vset.pattern.permute.xlu0 0
    %280 = vperm.xlu0 %279, %v277
    %v281 = vpop.permute.xlu0 %280
    %v288 = vunpack.c.l.b16 %v272
    %v289 = vunpack.c.l.b16 %v273
    %v290 = vunpack.c.l.b16 %v274
    %v291 = vunpack.c.l.b16 %v275
    %v292 = vunpack.c.l.b16 %v276
    %v293 = vpack.c.b16 %v289, %v288
    %v294 = vpack.c.b16 %v291, %v290
    %v295 = vpack.c.b16 %v292, %v292
    %vm298 = vcmask 293888
    %v300 = vsel %vm298, %v271, 0
    %vm302 = vcmask 1041408
    %v304 = vsel %vm302, %v295, 0
    %306 = vmatprep.subr.bf16.mxu0 0
    %307 = vmatpush1.bf16.msra.mxu0 0
    %308 = vmatprep.subr.bf16.mxu0 0
    %309 = vmatpush1.bf16.msra.mxu0 0
    %310 = vmatprep.subr.bf16.mxu0 0
    %311 = vmatpush1.bf16.msra.mxu0 0
    %312 = vmatprep.subr.bf16.mxu0 0
    %313 = vmatpush1.bf16.msra.mxu0 0
    %314 = vmatprep.subr.bf16.mxu0 0
    %315 = vmatpush1.bf16.msra.mxu0 0
    %316 = vmatprep.subr.bf16.mxu0 0
    %317 = vmatpush1.bf16.msra.mxu0 %v304
    %318 = vmatprep.subr.bf16.mxu0 0
    %319 = vmatpush1.bf16.msra.mxu0 %v294
    %320 = vmatprep.subr.bf16.mxu0 0
    %321 = vmatpush1.bf16.msra.mxu0 %v293
    %322 = vmatprep.subr.bf16.mxu0 0
    %323 = vmatpush2.bf16.msra.mxu0 0
    %324 = vmatprep.subr.bf16.mxu0 0
    %325 = vmatpush2.bf16.msra.mxu0 0
    %326 = vmatprep.subr.bf16.mxu0 0
    %327 = vmatpush2.bf16.msra.mxu0 0
    %328 = vmatprep.subr.bf16.mxu0 0
    %329 = vmatpush2.bf16.msra.mxu0 0
    %330 = vmatprep.subr.bf16.mxu0 0
    %331 = vmatpush2.bf16.msra.mxu0 0
    %332 = vmatprep.subr.bf16.mxu0 0
    %333 = vmatpush2.bf16.msra.mxu0 0
    %334 = vmatprep.subr.bf16.mxu0 0
    %335 = vmatpush2.bf16.msra.mxu0 0
    %336 = vmatprep.subr.bf16.mxu0 0
    %337 = vmatpush2.bf16.msra.mxu0 0
    %338 = vmatprep.mubr.bf16.mxu0 0
    %339 = vmatmul.mubr.bf16.gmra.mxu0 %v300
    %v340 = vpop.f32.mrf.mxu0
    %v341 = vadd.f32 %v281, %v340
    %v342 = vpop.f32.mrf.mxu0
    %v343 = vpop.f32.mrf.mxu0
    %v344 = vpop.f32.mrf.mxu0
    %345 = vdwg.mxu0
    %v346 = vmax.f32 %v341, 0.0
    %v347 = vld [vmem:[%s5] sm:$0xf]
    %v348 = vld [vmem:[%s5 + $0x4] sm:$0xf]
    %v349 = vpack.c.bf16 %v346, %v346
    %v350 = vld [vmem:[%s6] sm:$0xff]
    %v351 = vld [vmem:[%s6 + $0x8] sm:$0xff]
    %353 = vset.pattern.permute.xlu0 0
    %354 = vperm.xlu0 %353, %v350
    %v355 = vpop.permute.xlu0 %354
    %358 = vset.pattern.permute.xlu0 0
    %359 = vperm.xlu0 %358, %v351
    %v360 = vpop.permute.xlu0 %359
    %v364 = vunpack.c.l.b16 %v347
    %v365 = vunpack.c.l.b16 %v348
    %v366 = vpack.c.b16 %v365, %v364
    %vm367 = vcmask 31744
    %v369 = vsel %vm367, %v366, 0
    %v372 = vsel %vm302, %v349, 0
    %374 = vmatprep.subr.bf16.mxu0 0
    %375 = vmatpush1.bf16.msra.mxu0 0
    %376 = vmatprep.subr.bf16.mxu0 0
    %377 = vmatpush1.bf16.msra.mxu0 0
    %378 = vmatprep.subr.bf16.mxu0 0
    %379 = vmatpush1.bf16.msra.mxu0 0
    %380 = vmatprep.subr.bf16.mxu0 0
    %381 = vmatpush1.bf16.msra.mxu0 0
    %382 = vmatprep.subr.bf16.mxu0 0
    %383 = vmatpush1.bf16.msra.mxu0 0
    %384 = vmatprep.subr.bf16.mxu0 0
    %385 = vmatpush1.bf16.msra.mxu0 0
    %386 = vmatprep.subr.bf16.mxu0 0
    %387 = vmatpush1.bf16.msra.mxu0 0
    %388 = vmatprep.subr.bf16.mxu0 0
    %389 = vmatpush1.bf16.msra.mxu0 %v372
    %390 = vmatprep.subr.bf16.mxu0 0
    %391 = vmatpush2.bf16.msra.mxu0 0
    %392 = vmatprep.subr.bf16.mxu0 0
    %393 = vmatpush2.bf16.msra.mxu0 0
    %394 = vmatprep.subr.bf16.mxu0 0
    %395 = vmatpush2.bf16.msra.mxu0 0
    %396 = vmatprep.subr.bf16.mxu0 0
    %397 = vmatpush2.bf16.msra.mxu0 0
    %398 = vmatprep.subr.bf16.mxu0 0
    %399 = vmatpush2.bf16.msra.mxu0 0
    %400 = vmatprep.subr.bf16.mxu0 0
    %401 = vmatpush2.bf16.msra.mxu0 0
    %402 = vmatprep.subr.bf16.mxu0 0
    %403 = vmatpush2.bf16.msra.mxu0 0
    %404 = vmatprep.subr.bf16.mxu0 0
    %405 = vmatpush2.bf16.msra.mxu0 0
    %406 = vmatprep.mubr.bf16.mxu0 0
    %407 = vmatmul.mubr.bf16.gmra.mxu0 %v369
    %v408 = vpop.f32.mrf.mxu0
    %v409 = vadd.f32 %v355, %v408
    %v410 = vpop.f32.mrf.mxu0
    %v411 = vpop.f32.mrf.mxu0
    %v412 = vadd.f32 %v360, %v411
    %v413 = vpop.f32.mrf.mxu0
    %414 = vdwg.mxu0
    %vm415 = vcmask 523264
    %v416 = vsel %vm415, %v409, 0.0
    %417 = vadd.xlane.f32.xlu0 %v416
    %v418 = vpop.xlane.xlu0 %417
    %v419 = vsel %vm415, %v412, 0.0
    %420 = vadd.xlane.f32.xlu0 %v419
    %v421 = vpop.xlane.xlu0 %420
    %v422 = vrcp.pop 64.0
    %v423 = vmul.f32 %v418, %v422
    %v424 = vmul.f32 %v421, %v422
    %v425 = vld [vmem:[%s7] sm:$0x3]
    %v426 = vpack.c.bf16 %v424, %v423
    %v428 = vsel %vm71, %v425, 0
    %430 = vmatprep.subr.bf16.mxu0 0
    %431 = vmatpush1.bf16.msra.mxu0 0
    %432 = vmatprep.subr.bf16.mxu0 0
    %433 = vmatpush1.bf16.msra.mxu0 0
    %434 = vmatprep.subr.bf16.mxu0 0
    %435 = vmatpush1.bf16.msra.mxu0 0
    %436 = vmatprep.subr.bf16.mxu0 0
    %437 = vmatpush1.bf16.msra.mxu0 0
    %438 = vmatprep.subr.bf16.mxu0 0
    %439 = vmatpush1.bf16.msra.mxu0 0
    %440 = vmatprep.subr.bf16.mxu0 0
    %441 = vmatpush1.bf16.msra.mxu0 0
    %442 = vmatprep.subr.bf16.mxu0 0
    %443 = vmatpush1.bf16.msra.mxu0 0
    %444 = vmatprep.subr.bf16.mxu0 0
    %445 = vmatpush1.bf16.msra.mxu0 %v426
    %446 = vmatprep.subr.bf16.mxu0 0
    %447 = vmatpush2.bf16.msra.mxu0 0
    %448 = vmatprep.subr.bf16.mxu0 0
    %449 = vmatpush2.bf16.msra.mxu0 0
    %450 = vmatprep.subr.bf16.mxu0 0
    %451 = vmatpush2.bf16.msra.mxu0 0
    %452 = vmatprep.subr.bf16.mxu0 0
    %453 = vmatpush2.bf16.msra.mxu0 0
    %454 = vmatprep.subr.bf16.mxu0 0
    %455 = vmatpush2.bf16.msra.mxu0 0
    %456 = vmatprep.subr.bf16.mxu0 0
    %457 = vmatpush2.bf16.msra.mxu0 0
    %458 = vmatprep.subr.bf16.mxu0 0
    %459 = vmatpush2.bf16.msra.mxu0 0
    %460 = vmatprep.subr.bf16.mxu0 0
    %461 = vmatpush2.bf16.msra.mxu0 0
    %462 = vmatprep.mubr.bf16.mxu0 0
    %463 = vmatmul.mubr.bf16.gmra.mxu0 %v428
    %v464 = vpop.f32.mrf.mxu0
    %v465 = vadd.f32 0.0, %v464
    %v466 = vpop.f32.mrf.mxu0
    %v467 = vpop.f32.mrf.mxu0
    %v468 = vpop.f32.mrf.mxu0
    %469 = vdwg.mxu0
    %v470 = vmax.f32 %v465, 0.0
    %v471 = vld [vmem:[%s8] sm:$0xf]
    %v472 = vld [vmem:[%s8 + $0x4] sm:$0xf]
    %v473 = vpack.c.bf16 %v470, %v470
    %v476 = vunpack.c.l.b16 %v471
    %v477 = vunpack.c.l.b16 %v472
    %v478 = vpack.c.b16 %v477, %v476
    %v480 = vsel %vm367, %v478, 0
    %v483 = vsel %vm302, %v473, 0
    %485 = vmatprep.subr.bf16.mxu0 0
    %486 = vmatpush1.bf16.msra.mxu0 0
    %487 = vmatprep.subr.bf16.mxu0 0
    %488 = vmatpush1.bf16.msra.mxu0 0
    %489 = vmatprep.subr.bf16.mxu0 0
    %490 = vmatpush1.bf16.msra.mxu0 0
    %491 = vmatprep.subr.bf16.mxu0 0
    %492 = vmatpush1.bf16.msra.mxu0 0
    %493 = vmatprep.subr.bf16.mxu0 0
    %494 = vmatpush1.bf16.msra.mxu0 0
    %495 = vmatprep.subr.bf16.mxu0 0
    %496 = vmatpush1.bf16.msra.mxu0 0
    %497 = vmatprep.subr.bf16.mxu0 0
    %498 = vmatpush1.bf16.msra.mxu0 0
    %499 = vmatprep.subr.bf16.mxu0 0
    %500 = vmatpush1.bf16.msra.mxu0 %v483
    %501 = vmatprep.subr.bf16.mxu0 0
    %502 = vmatpush2.bf16.msra.mxu0 0
    %503 = vmatprep.subr.bf16.mxu0 0
    %504 = vmatpush2.bf16.msra.mxu0 0
    %505 = vmatprep.subr.bf16.mxu0 0
    %506 = vmatpush2.bf16.msra.mxu0 0
    %507 = vmatprep.subr.bf16.mxu0 0
    %508 = vmatpush2.bf16.msra.mxu0 0
    %509 = vmatprep.subr.bf16.mxu0 0
    %510 = vmatpush2.bf16.msra.mxu0 0
    %511 = vmatprep.subr.bf16.mxu0 0
    %512 = vmatpush2.bf16.msra.mxu0 0
    %513 = vmatprep.subr.bf16.mxu0 0
    %514 = vmatpush2.bf16.msra.mxu0 0
    %515 = vmatprep.subr.bf16.mxu0 0
    %516 = vmatpush2.bf16.msra.mxu0 0
    %517 = vmatprep.mubr.bf16.mxu0 0
    %518 = vmatmul.mubr.bf16.gmra.mxu0 %v480
    %v519 = vpop.f32.mrf.mxu0
    %v520 = vadd.f32 0.0, %v519
    %v521 = vpop.f32.mrf.mxu0
    %v522 = vpop.f32.mrf.mxu0
    %v523 = vadd.f32 0.0, %v522
    %v524 = vpop.f32.mrf.mxu0
    %525 = vdwg.mxu0
    %v526 = vxor.u32 %v520, 2147483648
    %v527 = vxor.u32 %v523, 2147483648
    %v528 = vmul.f32 %v526, 1.442695
    %v529 = vpow.pop %v528
    %v530 = vmul.f32 %v527, 1.442695
    %v531 = vpow.pop %v530
    %v532 = vadd.f32 %v529, 1.0
    %v533 = vadd.f32 %v531, 1.0
    %v534 = vrcp.pop %v532
    %v535 = vmul.f32 1.0, %v534
    %v536 = vrcp.pop %v533
    %v537 = vmul.f32 1.0, %v536
    %539 = vset.pattern.permute.xlu0 0
    %540 = vperm.xlu0 %539, %v535
    %v541 = vpop.permute.xlu0 %540
    %544 = vset.pattern.permute.xlu0 0
    %545 = vperm.xlu0 %544, %v537
    %v546 = vpop.permute.xlu0 %545
    %v548 = vmul.f32 %v409, %v541
    %v549 = vmul.f32 %v412, %v546
    %v550 = vld [vmem:[%s0] sm:$0xf]
    %v551 = vld [vmem:[%s0 + $0x4] sm:$0xf]
    %v552 = vunpack.c.l.bf16 %v550
    %v553 = vunpack.c.l.bf16 %v551
    %v554 = vadd.f32 %v548, %v552
    %v555 = vadd.f32 %v549, %v553
    %v556 = vmax.f32 %v554, 0.0
    %v557 = vmax.f32 %v555, 0.0
    %v558 = vpack.c.bf16 %v557, %v556
    %v560 = vunpack.c.l.b16 %v558
    %v561 = vunpack.c.h.b16 %v558
    %v562 = vpack.c.b16 %v560, %v560
    %v563 = vpack.c.b16 %v561, %v561
    %vm566 = vcmask 519168
    %567 = vst.msk [vmem:[#allocation4] sm:$0xf] %vm566, %v562
    %568 = vst.msk [vmem:[#allocation4 + $0x4] sm:$0xf] %vm566, %v563
    %v569 = vld [vmem:[%s1] sm:$0x3]
    %s570 = scalar_lea.vmem %s0, 8
    %v571 = vld [vmem:[%s570] sm:$0xf]
    %v572 = vld [vmem:[%s570 + $0x4] sm:$0xf]
    %v573 = vld [vmem:[%s2] sm:$0xf]
    %575 = vset.pattern.permute.xlu0 0
    %576 = vperm.xlu0 %575, %v573
    %v577 = vpop.permute.xlu0 %576
    %v581 = vunpack.c.l.b16 %v571
    %v582 = vunpack.c.l.b16 %v572
    %v583 = vpack.c.b16 %v582, %v581
    %v586 = vsel %vm71, %v569, 0
    %588 = vmatprep.subr.bf16.mxu0 0
    %589 = vmatpush1.bf16.msra.mxu0 0
    %590 = vmatprep.subr.bf16.mxu0 0
    %591 = vmatpush1.bf16.msra.mxu0 0
    %592 = vmatprep.subr.bf16.mxu0 0
    %593 = vmatpush1.bf16.msra.mxu0 0
    %594 = vmatprep.subr.bf16.mxu0 0
    %595 = vmatpush1.bf16.msra.mxu0 0
    %596 = vmatprep.subr.bf16.mxu0 0
    %597 = vmatpush1.bf16.msra.mxu0 0
    %598 = vmatprep.subr.bf16.mxu0 0
    %599 = vmatpush1.bf16.msra.mxu0 0
    %600 = vmatprep.subr.bf16.mxu0 0
    %601 = vmatpush1.bf16.msra.mxu0 0
    %602 = vmatprep.subr.bf16.mxu0 0
    %603 = vmatpush1.bf16.msra.mxu0 %v583
    %604 = vmatprep.subr.bf16.mxu0 0
    %605 = vmatpush2.bf16.msra.mxu0 0
    %606 = vmatprep.subr.bf16.mxu0 0
    %607 = vmatpush2.bf16.msra.mxu0 0
    %608 = vmatprep.subr.bf16.mxu0 0
    %609 = vmatpush2.bf16.msra.mxu0 0
    %610 = vmatprep.subr.bf16.mxu0 0
    %611 = vmatpush2.bf16.msra.mxu0 0
    %612 = vmatprep.subr.bf16.mxu0 0
    %613 = vmatpush2.bf16.msra.mxu0 0
    %614 = vmatprep.subr.bf16.mxu0 0
    %615 = vmatpush2.bf16.msra.mxu0 0
    %616 = vmatprep.subr.bf16.mxu0 0
    %617 = vmatpush2.bf16.msra.mxu0 0
    %618 = vmatprep.subr.bf16.mxu0 0
    %619 = vmatpush2.bf16.msra.mxu0 0
    %620 = vmatprep.mubr.bf16.mxu0 0
    %621 = vmatmul.mubr.bf16.gmra.mxu0 %v586
    %v622 = vpop.f32.mrf.mxu0
    %v623 = vadd.f32 %v577, %v622
    %v624 = vpop.f32.mrf.mxu0
    %v625 = vpop.f32.mrf.mxu0
    %v626 = vpop.f32.mrf.mxu0
    %627 = vdwg.mxu0
    %v628 = vmax.f32 %v623, 0.0
    %v629 = vpack.c.bf16 %v628, %v628
    %v632 = vunpack.c.l.s4 1983009808
    %v633 = vunpack.c.0.s8 %v632
    %v634 = vlaneseq
    %v635 = vshrl.u32 %v634, 7
    %v636 = vsub.s32 %v633, %v635
    %v637 = vrot.slane %v629, %v636
    %638 = vrot.lane.b32.xlu0 %v637, 9
    %v639 = vpop.permute.xlu0 %638
    %641 = vst.msk [vmem:[#allocation2] sm:$0x3] %vm128, %v639
    %v642 = vld [vmem:[#allocation2] sm:$0x3]
    %v643 = vsel %vm133, %v642, 0
    %644 = vst.msk [vmem:[#allocation3] sm:$0x3] %vm135, %v643
    %v645 = vld [vmem:[#allocation2] sm:$0x3]
    %v647 = vcombine.low %v645, %v645
    %v649 = vunpack.c.l.s4 1983009808
    %v650 = vunpack.c.0.s8 %v649
    %v651 = vlaneseq
    %v652 = vshrl.u32 %v651, 7
    %v653 = vsub.s32 %v650, %v652
    %v654 = vrot.slane %v647, %v653
    %655 = vrot.lane.b32.xlu0 %v654, 127
    %v656 = vpop.permute.xlu0 %655
    %658 = vst.msk [vmem:[#allocation3] sm:$0xc] %vm150, %v656
    %v659 = vld [vmem:[#allocation2] sm:$0x3]
    %v660 = vsel %vm159, %v659, 0
    %v663 = vunpack.c.l.s4 1983009808
    %v664 = vunpack.c.0.s8 %v663
    %v665 = vlaneseq
    %v666 = vshrl.u32 %v665, 7
    %v667 = vsub.s32 %v664, %v666
    %v668 = vrot.slane %v660, %v667
    %669 = vrot.lane.b32.xlu0 %v668, 126
    %v670 = vpop.permute.xlu0 %669
    %672 = vst.msk [vmem:[#allocation3 + $0x4] sm:$0x3] %vm135, %v670
    %v673 = vld [vmem:[#allocation2] sm:$0x3]
    %v674 = vsel %vm177, %v673, 0
    %v676 = vcombine.low %v674, %v674
    %v678 = vunpack.c.l.s4 1983009808
    %v679 = vunpack.c.0.s8 %v678
    %v680 = vlaneseq
    %v681 = vshrl.u32 %v680, 7
    %v682 = vsub.s32 %v679, %v681
    %v683 = vrot.slane %v676, %v682
    %684 = vrot.lane.b32.xlu0 %v683, 120
    %v685 = vpop.permute.xlu0 %684
    %687 = vst.msk [vmem:[#allocation3 + $0x4] sm:$0xc] %vm150, %v685
    %v688 = vld [vmem:[#allocation2] sm:$0x3]
    %v691 = vunpack.c.l.s4 1983009808
    %v692 = vunpack.c.0.s8 %v691
    %v693 = vlaneseq
    %v694 = vshrl.u32 %v693, 7
    %v695 = vsub.s32 %v692, %v694
    %v696 = vrot.slane %v688, %v695
    %697 = vrot.lane.b32.xlu0 %v696, 119
    %v698 = vpop.permute.xlu0 %697
    %700 = vst.msk [vmem:[#allocation3 + $0x8] sm:$0x3] %vm135, %v698
    %v701 = vld [vmem:[#allocation2] sm:$0x3]
    %v702 = vsel %vm208, %v701, 0
    %v704 = vcombine.low %v702, %v702
    %v706 = vunpack.c.l.s4 1983009808
    %v707 = vunpack.c.0.s8 %v706
    %v708 = vlaneseq
    %v709 = vshrl.u32 %v708, 7
    %v710 = vsub.s32 %v707, %v709
    %v711 = vrot.slane %v704, %v710
    %712 = vrot.lane.b32.xlu0 %v711, 118
    %v713 = vpop.permute.xlu0 %712
    %715 = vst.msk [vmem:[#allocation3 + $0x8] sm:$0xc] %vm150, %v713
    %v716 = vld [vmem:[#allocation2] sm:$0x3]
    %v717 = vsel %vm226, %v716, 0
    %v720 = vunpack.c.l.s4 1983009808
    %v721 = vunpack.c.0.s8 %v720
    %v722 = vlaneseq
    %v723 = vshrl.u32 %v722, 7
    %v724 = vsub.s32 %v721, %v723
    %v725 = vrot.slane %v717, %v724
    %726 = vrot.lane.b32.xlu0 %v725, 112
    %v727 = vpop.permute.xlu0 %726
    %729 = vst.msk [vmem:[#allocation3 + $0xc] sm:$0x3] %vm135, %v727
    %v730 = vld [vmem:[#allocation2] sm:$0x3]
    %v732 = vcombine.low %v730, %v730
    %v734 = vunpack.c.l.s4 1983009808
    %v735 = vunpack.c.0.s8 %v734
    %v736 = vlaneseq
    %v737 = vshrl.u32 %v736, 7
    %v738 = vsub.s32 %v735, %v737
    %v739 = vrot.slane %v732, %v738
    %740 = vrot.lane.b32.xlu0 %v739, 111
    %v741 = vpop.permute.xlu0 %740
    %743 = vst.msk [vmem:[#allocation3 + $0xc] sm:$0xc] %vm150, %v741
    %v744 = vld [vmem:[#allocation2] sm:$0x3]
    %v745 = vsel %vm257, %v744, 0
    %v748 = vunpack.c.l.s4 1983009808
    %v749 = vunpack.c.0.s8 %v748
    %v750 = vlaneseq
    %v751 = vshrl.u32 %v750, 7
    %v752 = vsub.s32 %v749, %v751
    %v753 = vrot.slane %v745, %v752
    %754 = vrot.lane.b32.xlu0 %v753, 110
    %v755 = vpop.permute.xlu0 %754
    %757 = vst.msk [vmem:[#allocation3 + $0x10] sm:$0x3] %vm135, %v755
    %v758 = vld [vmem:[%s3] sm:$0x3]
    %v759 = vld [vmem:[#allocation3] sm:$0xf]
    %v760 = vld [vmem:[#allocation3 + $0x4] sm:$0xf]
    %v761 = vld [vmem:[#allocation3 + $0x8] sm:$0xf]
    %v762 = vld [vmem:[#allocation3 + $0xc] sm:$0xf]
    %v763 = vld [vmem:[#allocation3 + $0x10] sm:$0x3]
    %v764 = vld [vmem:[%s4] sm:$0xf]
    %766 = vset.pattern.permute.xlu0 0
    %767 = vperm.xlu0 %766, %v764
    %v768 = vpop.permute.xlu0 %767
    %v775 = vunpack.c.l.b16 %v759
    %v776 = vunpack.c.l.b16 %v760
    %v777 = vunpack.c.l.b16 %v761
    %v778 = vunpack.c.l.b16 %v762
    %v779 = vunpack.c.l.b16 %v763
    %v780 = vpack.c.b16 %v776, %v775
    %v781 = vpack.c.b16 %v778, %v777
    %v782 = vpack.c.b16 %v779, %v779
    %v786 = vsel %vm298, %v758, 0
    %v789 = vsel %vm302, %v782, 0
    %791 = vmatprep.subr.bf16.mxu0 0
    %792 = vmatpush1.bf16.msra.mxu0 0
    %793 = vmatprep.subr.bf16.mxu0 0
    %794 = vmatpush1.bf16.msra.mxu0 0
    %795 = vmatprep.subr.bf16.mxu0 0
    %796 = vmatpush1.bf16.msra.mxu0 0
    %797 = vmatprep.subr.bf16.mxu0 0
    %798 = vmatpush1.bf16.msra.mxu0 0
    %799 = vmatprep.subr.bf16.mxu0 0
    %800 = vmatpush1.bf16.msra.mxu0 0
    %801 = vmatprep.subr.bf16.mxu0 0
    %802 = vmatpush1.bf16.msra.mxu0 %v789
    %803 = vmatprep.subr.bf16.mxu0 0
    %804 = vmatpush1.bf16.msra.mxu0 %v781
    %805 = vmatprep.subr.bf16.mxu0 0
    %806 = vmatpush1.bf16.msra.mxu0 %v780
    %807 = vmatprep.subr.bf16.mxu0 0
    %808 = vmatpush2.bf16.msra.mxu0 0
    %809 = vmatprep.subr.bf16.mxu0 0
    %810 = vmatpush2.bf16.msra.mxu0 0
    %811 = vmatprep.subr.bf16.mxu0 0
    %812 = vmatpush2.bf16.msra.mxu0 0
    %813 = vmatprep.subr.bf16.mxu0 0
    %814 = vmatpush2.bf16.msra.mxu0 0
    %815 = vmatprep.subr.bf16.mxu0 0
    %816 = vmatpush2.bf16.msra.mxu0 0
    %817 = vmatprep.subr.bf16.mxu0 0
    %818 = vmatpush2.bf16.msra.mxu0 0
    %819 = vmatprep.subr.bf16.mxu0 0
    %820 = vmatpush2.bf16.msra.mxu0 0
    %821 = vmatprep.subr.bf16.mxu0 0
    %822 = vmatpush2.bf16.msra.mxu0 0
    %823 = vmatprep.mubr.bf16.mxu0 0
    %824 = vmatmul.mubr.bf16.gmra.mxu0 %v786
    %v825 = vpop.f32.mrf.mxu0
    %v826 = vadd.f32 %v768, %v825
    %v827 = vpop.f32.mrf.mxu0
    %v828 = vpop.f32.mrf.mxu0
    %v829 = vpop.f32.mrf.mxu0
    %830 = vdwg.mxu0
    %v831 = vmax.f32 %v826, 0.0
    %v832 = vld [vmem:[%s5] sm:$0xf]
    %v833 = vld [vmem:[%s5 + $0x4] sm:$0xf]
    %v834 = vpack.c.bf16 %v831, %v831
    %v835 = vld [vmem:[%s6] sm:$0xff]
    %v836 = vld [vmem:[%s6 + $0x8] sm:$0xff]
    %838 = vset.pattern.permute.xlu0 0
    %839 = vperm.xlu0 %838, %v835
    %v840 = vpop.permute.xlu0 %839
    %843 = vset.pattern.permute.xlu0 0
    %844 = vperm.xlu0 %843, %v836
    %v845 = vpop.permute.xlu0 %844
    %v849 = vunpack.c.l.b16 %v832
    %v850 = vunpack.c.l.b16 %v833
    %v851 = vpack.c.b16 %v850, %v849
    %v853 = vsel %vm367, %v851, 0
    %v856 = vsel %vm302, %v834, 0
    %858 = vmatprep.subr.bf16.mxu0 0
    %859 = vmatpush1.bf16.msra.mxu0 0
    %860 = vmatprep.subr.bf16.mxu0 0
    %861 = vmatpush1.bf16.msra.mxu0 0
    %862 = vmatprep.subr.bf16.mxu0 0
    %863 = vmatpush1.bf16.msra.mxu0 0
    %864 = vmatprep.subr.bf16.mxu0 0
    %865 = vmatpush1.bf16.msra.mxu0 0
    %866 = vmatprep.subr.bf16.mxu0 0
    %867 = vmatpush1.bf16.msra.mxu0 0
    %868 = vmatprep.subr.bf16.mxu0 0
    %869 = vmatpush1.bf16.msra.mxu0 0
    %870 = vmatprep.subr.bf16.mxu0 0
    %871 = vmatpush1.bf16.msra.mxu0 0
    %872 = vmatprep.subr.bf16.mxu0 0
    %873 = vmatpush1.bf16.msra.mxu0 %v856
    %874 = vmatprep.subr.bf16.mxu0 0
    %875 = vmatpush2.bf16.msra.mxu0 0
    %876 = vmatprep.subr.bf16.mxu0 0
    %877 = vmatpush2.bf16.msra.mxu0 0
    %878 = vmatprep.subr.bf16.mxu0 0
    %879 = vmatpush2.bf16.msra.mxu0 0
    %880 = vmatprep.subr.bf16.mxu0 0
    %881 = vmatpush2.bf16.msra.mxu0 0
    %882 = vmatprep.subr.bf16.mxu0 0
    %883 = vmatpush2.bf16.msra.mxu0 0
    %884 = vmatprep.subr.bf16.mxu0 0
    %885 = vmatpush2.bf16.msra.mxu0 0
    %886 = vmatprep.subr.bf16.mxu0 0
    %887 = vmatpush2.bf16.msra.mxu0 0
    %888 = vmatprep.subr.bf16.mxu0 0
    %889 = vmatpush2.bf16.msra.mxu0 0
    %890 = vmatprep.mubr.bf16.mxu0 0
    %891 = vmatmul.mubr.bf16.gmra.mxu0 %v853
    %v892 = vpop.f32.mrf.mxu0
    %v893 = vadd.f32 %v840, %v892
    %v894 = vpop.f32.mrf.mxu0
    %v895 = vpop.f32.mrf.mxu0
    %v896 = vadd.f32 %v845, %v895
    %v897 = vpop.f32.mrf.mxu0
    %898 = vdwg.mxu0
    %v899 = vsel %vm415, %v893, 0.0
    %900 = vadd.xlane.f32.xlu0 %v899
    %v901 = vpop.xlane.xlu0 %900
    %v902 = vsel %vm415, %v896, 0.0
    %903 = vadd.xlane.f32.xlu0 %v902
    %v904 = vpop.xlane.xlu0 %903
    %v905 = vmul.f32 %v901, %v422
    %v906 = vmul.f32 %v904, %v422
    %v907 = vld [vmem:[%s7] sm:$0x3]
    %v908 = vpack.c.bf16 %v906, %v905
    %v910 = vsel %vm71, %v907, 0
    %912 = vmatprep.subr.bf16.mxu0 0
    %913 = vmatpush1.bf16.msra.mxu0 0
    %914 = vmatprep.subr.bf16.mxu0 0
    %915 = vmatpush1.bf16.msra.mxu0 0
    %916 = vmatprep.subr.bf16.mxu0 0
    %917 = vmatpush1.bf16.msra.mxu0 0
    %918 = vmatprep.subr.bf16.mxu0 0
    %919 = vmatpush1.bf16.msra.mxu0 0
    %920 = vmatprep.subr.bf16.mxu0 0
    %921 = vmatpush1.bf16.msra.mxu0 0
    %922 = vmatprep.subr.bf16.mxu0 0
    %923 = vmatpush1.bf16.msra.mxu0 0
    %924 = vmatprep.subr.bf16.mxu0 0
    %925 = vmatpush1.bf16.msra.mxu0 0
    %926 = vmatprep.subr.bf16.mxu0 0
    %927 = vmatpush1.bf16.msra.mxu0 %v908
    %928 = vmatprep.subr.bf16.mxu0 0
    %929 = vmatpush2.bf16.msra.mxu0 0
    %930 = vmatprep.subr.bf16.mxu0 0
    %931 = vmatpush2.bf16.msra.mxu0 0
    %932 = vmatprep.subr.bf16.mxu0 0
    %933 = vmatpush2.bf16.msra.mxu0 0
    %934 = vmatprep.subr.bf16.mxu0 0
    %935 = vmatpush2.bf16.msra.mxu0 0
    %936 = vmatprep.subr.bf16.mxu0 0
    %937 = vmatpush2.bf16.msra.mxu0 0
    %938 = vmatprep.subr.bf16.mxu0 0
    %939 = vmatpush2.bf16.msra.mxu0 0
    %940 = vmatprep.subr.bf16.mxu0 0
    %941 = vmatpush2.bf16.msra.mxu0 0
    %942 = vmatprep.subr.bf16.mxu0 0
    %943 = vmatpush2.bf16.msra.mxu0 0
    %944 = vmatprep.mubr.bf16.mxu0 0
    %945 = vmatmul.mubr.bf16.gmra.mxu0 %v910
    %v946 = vpop.f32.mrf.mxu0
    %v947 = vadd.f32 0.0, %v946
    %v948 = vpop.f32.mrf.mxu0
    %v949 = vpop.f32.mrf.mxu0
    %v950 = vpop.f32.mrf.mxu0
    %951 = vdwg.mxu0
    %v952 = vmax.f32 %v947, 0.0
    %v953 = vld [vmem:[%s8] sm:$0xf]
    %v954 = vld [vmem:[%s8 + $0x4] sm:$0xf]
    %v955 = vpack.c.bf16 %v952, %v952
    %v958 = vunpack.c.l.b16 %v953
    %v959 = vunpack.c.l.b16 %v954
    %v960 = vpack.c.b16 %v959, %v958
    %v962 = vsel %vm367, %v960, 0
    %v965 = vsel %vm302, %v955, 0
    %967 = vmatprep.subr.bf16.mxu0 0
    %968 = vmatpush1.bf16.msra.mxu0 0
    %969 = vmatprep.subr.bf16.mxu0 0
    %970 = vmatpush1.bf16.msra.mxu0 0
    %971 = vmatprep.subr.bf16.mxu0 0
    %972 = vmatpush1.bf16.msra.mxu0 0
    %973 = vmatprep.subr.bf16.mxu0 0
    %974 = vmatpush1.bf16.msra.mxu0 0
    %975 = vmatprep.subr.bf16.mxu0 0
    %976 = vmatpush1.bf16.msra.mxu0 0
    %977 = vmatprep.subr.bf16.mxu0 0
    %978 = vmatpush1.bf16.msra.mxu0 0
    %979 = vmatprep.subr.bf16.mxu0 0
    %980 = vmatpush1.bf16.msra.mxu0 0
    %981 = vmatprep.subr.bf16.mxu0 0
    %982 = vmatpush1.bf16.msra.mxu0 %v965
    %983 = vmatprep.subr.bf16.mxu0 0
    %984 = vmatpush2.bf16.msra.mxu0 0
    %985 = vmatprep.subr.bf16.mxu0 0
    %986 = vmatpush2.bf16.msra.mxu0 0
    %987 = vmatprep.subr.bf16.mxu0 0
    %988 = vmatpush2.bf16.msra.mxu0 0
    %989 = vmatprep.subr.bf16.mxu0 0
    %990 = vmatpush2.bf16.msra.mxu0 0
    %991 = vmatprep.subr.bf16.mxu0 0
    %992 = vmatpush2.bf16.msra.mxu0 0
    %993 = vmatprep.subr.bf16.mxu0 0
    %994 = vmatpush2.bf16.msra.mxu0 0
    %995 = vmatprep.subr.bf16.mxu0 0
    %996 = vmatpush2.bf16.msra.mxu0 0
    %997 = vmatprep.subr.bf16.mxu0 0
    %998 = vmatpush2.bf16.msra.mxu0 0
    %999 = vmatprep.mubr.bf16.mxu0 0
    %1000 = vmatmul.mubr.bf16.gmra.mxu0 %v962
    %v1001 = vpop.f32.mrf.mxu0
    %v1002 = vadd.f32 0.0, %v1001
    %v1003 = vpop.f32.mrf.mxu0
    %v1004 = vpop.f32.mrf.mxu0
    %v1005 = vadd.f32 0.0, %v1004
    %v1006 = vpop.f32.mrf.mxu0
    %1007 = vdwg.mxu0
    %v1008 = vxor.u32 %v1002, 2147483648
    %v1009 = vxor.u32 %v1005, 2147483648
    %v1010 = vmul.f32 %v1008, 1.442695
    %v1011 = vpow.pop %v1010
    %v1012 = vmul.f32 %v1009, 1.442695
    %v1013 = vpow.pop %v1012
    %v1014 = vadd.f32 %v1011, 1.0
    %v1015 = vadd.f32 %v1013, 1.0
    %v1016 = vrcp.pop %v1014
    %v1017 = vmul.f32 1.0, %v1016
    %v1018 = vrcp.pop %v1015
    %v1019 = vmul.f32 1.0, %v1018
    %1021 = vset.pattern.permute.xlu0 0
    %1022 = vperm.xlu0 %1021, %v1017
    %v1023 = vpop.permute.xlu0 %1022
    %1026 = vset.pattern.permute.xlu0 0
    %1027 = vperm.xlu0 %1026, %v1019
    %v1028 = vpop.permute.xlu0 %1027
    %v1030 = vmul.f32 %v893, %v1023
    %v1031 = vmul.f32 %v896, %v1028
    %v1032 = vld [vmem:[%s570] sm:$0xf]
    %v1033 = vld [vmem:[%s570 + $0x4] sm:$0xf]
    %v1034 = vunpack.c.l.bf16 %v1032
    %v1035 = vunpack.c.l.bf16 %v1033
    %v1036 = vadd.f32 %v1030, %v1034
    %v1037 = vadd.f32 %v1031, %v1035
    %v1038 = vmax.f32 %v1036, 0.0
    %v1039 = vmax.f32 %v1037, 0.0
    %v1040 = vpack.c.bf16 %v1039, %v1038
    %v1042 = vunpack.c.l.b16 %v1040
    %v1043 = vunpack.c.h.b16 %v1040
    %v1044 = vpack.c.b16 %v1042, %v1042
    %v1045 = vpack.c.b16 %v1043, %v1043
    %s1048 = scalar_lea.vmem [#allocation4], 8
    %1049 = vst.msk [vmem:[%s1048] sm:$0xf] %vm566, %v1044
    %1050 = vst.msk [vmem:[%s1048 + $0x4] sm:$0xf] %vm566, %v1045
    // Predicated region
    $region38: #{tpu_custom_call.1} parent=1 // pred_check
      _
    $region39: #{tpu_custom_call.1} parent=1 // pred_check_branch
      %1052 = sbr.rel (0) target = $region41
    $region40: #{tpu_custom_call.1} parent=1 // pred_region
      %s1054 = ssub.s32 256, 256
      %1055 = vsyncadd [#allocation5], %s1054
      %s1056 = sshll.u32 [#allocation4], 4
      %s1057 = int_to_ptr.vmem [resolvable:$true] %s1056
      %1062 = dma.vmem_to_hbm [thread:$0]  %s1057, 256, %s9, [#allocation5], 64, 64, 4
    $region41: #{tpu_custom_call.1} parent=1 // pred_fallthru
      _
    // Predicated region
    $region42: #{tpu_custom_call.1} parent=1 // pred_check
      _
    $region43: #{tpu_custom_call.1} parent=1 // pred_check_branch
      %1064 = sbr.rel (0) target = $region45
    $region44: #{tpu_custom_call.1} parent=1 // pred_region
      %1065 = dma.done [#allocation5], 256
    $region45: #{tpu_custom_call.1} parent=1 // pred_fallthru
      _
    %1066 = vsyncpa [#allocation5], 1

</llo_original>
